<compile_context>
chip_gen: v6e
topology: v6e:2x2x1
jax: 0.10.0
libtpu: 0.0.40
codegen_flags: <defaults>
</compile_context>

<pallas_src>
import functools

import jax
import jax.numpy as jnp
from jax import lax
from jax.experimental import pallas as pl
from jax.experimental.pallas import tpu as pltpu

_EPS = 1e-8
_LANE = 128


def ntm_kernel(x_ref, r0_ref, mem0_ref,
               wx_ref, wr_ref, wh_ref, bl_ref, whd_ref, bhd_ref,
               out_ref, memout_ref,
               h_ref, c_ref, reads_ref,
               *, H, O, W, WH, R, B):
    f32 = jnp.float32
    t = pl.program_id(0)

    # ---- t == 0: initialize the recurrent state resident in VMEM ----
    @pl.when(t == 0)
    def _():
        h_ref[...] = jnp.zeros_like(h_ref)          # nn.LSTMCell zero state
        c_ref[...] = jnp.zeros_like(c_ref)
        reads_ref[...] = r0_ref[...]                 # read_vectors buffer
        memout_ref[...] = mem0_ref[...]              # memory kept (W, N), N on lanes

    x = x_ref[...]                                   # (B, I)
    h = h_ref[...]                                   # (B, H)
    c = c_ref[...]
    reads_row = reads_ref[...].reshape(1, R * W)     # same reads for every batch elt

    # ---- LSTMCell: x / reads / h gate contributions summed in-kernel ----
    z = (jnp.dot(x, wx_ref[...], preferred_element_type=f32)
         + jnp.dot(reads_row, wr_ref[...], preferred_element_type=f32)
         + jnp.dot(h, wh_ref[...], preferred_element_type=f32)
         + bl_ref[...])                              # (B, 4H), torch order i,f,g,o
    i_g = jax.nn.sigmoid(z[:, 0:H])
    f_g = jax.nn.sigmoid(z[:, H:2 * H])
    g_g = jnp.tanh(z[:, 2 * H:3 * H])
    o_g = jax.nn.sigmoid(z[:, 3 * H:4 * H])
    c_new = f_g * c + i_g * g_g
    h_new = o_g * jnp.tanh(c_new)
    h_ref[...] = h_new
    c_ref[...] = c_new

    # ---- fused fc_out + param_gen projection (single lane-padded matmul) ----
    hp = jnp.dot(h_new, whd_ref[...], preferred_element_type=f32) + bhd_ref[...]

    ctrl = hp[:, 0:O]                                # (B, O)
    col = O
    k_w = jnp.tanh(hp[:, col:col + WH * W]); col += WH * W
    beta_w = jax.nn.softplus(hp[:, col:col + WH]); col += WH
    e_w = jax.nn.sigmoid(hp[:, col:col + WH * W]); col += WH * W
    a_w = jnp.tanh(hp[:, col:col + WH * W]); col += WH * W
    k_r = jnp.tanh(hp[0:1, col:col + R * W]); col += R * W   # batch elt 0 only (torch)
    beta_r = jax.nn.softplus(hp[0:1, col:col + R])

    # ---- write heads: hoist everything that does not depend on memory ----
    nw = B * WH
    kw = k_w.reshape(nw, W)
    inv_kn = pl.reciprocal(
        jnp.sqrt(jnp.sum(kw * kw, axis=-1, keepdims=True)) + _EPS, approx=False)
    kb = kw * inv_kn * beta_w.reshape(nw, 1)         # beta folded into the key
    kb_t = kb.T                                      # (W, nw) columns for (W, N) memory
    e_t = e_w.reshape(nw, W).T                       # (W, nw)
    a_t = a_w.reshape(nw, W).T                       # (W, nw)

    mem = memout_ref[...]                            # (W, N)
    # Sequential writes (batch-major then head) -- Python-unrolled, nw is tiny.
    # TODO(synk): switch to lax.fori_loop(..., unroll=True) with mem as carry
    # if B * num_write_heads ever grows large.
    for j in range(nw):
        inv_mn = pl.reciprocal(
            jnp.sqrt(jnp.sum(mem * mem, axis=0, keepdims=True)) + _EPS,
            approx=False)                            # (1, N) memory row norms
        # beta*cosine on the VPU + sublane reduce (kept off the serial MXU path)
        zz = jnp.sum(kb_t[:, j:j + 1] * mem, axis=0, keepdims=True) * inv_mn  # (1, N)
        zz = zz - jnp.max(zz, axis=-1, keepdims=True)
        p = jnp.exp(zz)
        w_row = p * pl.reciprocal(jnp.sum(p, axis=-1, keepdims=True), approx=False)
        mem = mem * (1.0 - e_t[:, j:j + 1] * w_row) + a_t[:, j:j + 1] * w_row
    memout_ref[...] = mem

    # ---- read heads (batched, all on the final memory) ----
    krs = k_r.reshape(R, W)
    inv_krn = pl.reciprocal(
        jnp.sqrt(jnp.sum(krs * krs, axis=-1, keepdims=True)) + _EPS, approx=False)
    kbr = krs * inv_krn * beta_r.reshape(R, 1)       # beta folded into the read key
    inv_mn = pl.reciprocal(
        jnp.sqrt(jnp.sum(mem * mem, axis=0, keepdims=True)) + _EPS, approx=False)
    sim = jnp.dot(kbr, mem, preferred_element_type=f32) * inv_mn      # (R, N) lane-major
    sim = sim - jnp.max(sim, axis=-1, keepdims=True)
    p = jnp.exp(sim)
    w_r = p * pl.reciprocal(jnp.sum(p, axis=-1, keepdims=True), approx=False)
    new_reads = lax.dot_general(w_r, mem, (((1,), (1,)), ((), ())),
                                preferred_element_type=f32)           # (R, W)
    reads_ref[...] = new_reads

    # ---- lane-dense packed per-step output: rows [ctrl(B) | reads(R)], width 128 ----
    slab_top = jnp.concatenate([ctrl, jnp.zeros((B, _LANE - O), f32)], axis=1)
    slab_bot = jnp.concatenate([new_reads, jnp.zeros((R, _LANE - W), f32)], axis=1)
    out_ref[...] = jnp.concatenate([slab_top, slab_bot], axis=0)


def init_params(key, input_size, output_size, controller_size, word_size,
                num_read_heads, num_write_heads):
    H, W = controller_size, word_size
    CI = input_size + num_read_heads * W
    total_params = num_write_heads * (3 * W + 1) + num_read_heads * (W + 1)
    ks = jax.random.split(key, 8)
    s = 0.1
    return dict(
        weight_ih=jax.random.normal(ks[0], (4 * H, CI), jnp.float32) * s,
        weight_hh=jax.random.normal(ks[1], (4 * H, H), jnp.float32) * s,
        bias_ih=jax.random.normal(ks[2], (4 * H,), jnp.float32) * s,
        bias_hh=jax.random.normal(ks[3], (4 * H,), jnp.float32) * s,
        w_out=jax.random.normal(ks[4], (output_size, H), jnp.float32) * s,
        b_out=jax.random.normal(ks[5], (output_size,), jnp.float32) * s,
        w_pg=jax.random.normal(ks[6], (total_params, H), jnp.float32) * s,
        b_pg=jax.random.normal(ks[7], (total_params,), jnp.float32) * s,
    )


def fuse_params(params, *, input_size, output_size, word_size,
                num_read_heads, num_write_heads):
    """One-time host-side fusion / column reordering of the torch-layout params."""
    W, R, WH, O, I = word_size, num_read_heads, num_write_heads, output_size, input_size
    H = params["weight_hh"].shape[1]

    # Split the LSTM input weight into x- and read- parts (h part separate), so
    # the controller input never needs to be concatenated on the host.
    w_ih = params["weight_ih"]                                    # (4H, I + R*W)
    w_x = w_ih[:, :I].T                                           # (I, 4H)
    w_r = w_ih[:, I:].T                                           # (R*W, 4H)
    w_h = params["weight_hh"].T                                   # (H, 4H)
    b_lstm = (params["bias_ih"] + params["bias_hh"]).reshape(1, 4 * H)

    # Reorder param_gen columns so each component is contiguous:
    # [k_w(WH*W) | beta_w(WH) | e_w(WH*W) | a_w(WH*W) | k_r(R*W) | beta_r(R)]
    wp_size, rp_size = 3 * W + 1, W + 1
    wp = WH * wp_size
    idx_kw, idx_bw, idx_ew, idx_aw, idx_kr, idx_br = [], [], [], [], [], []
    for i in range(WH):
        base = i * wp_size
        idx_kw += list(range(base, base + W))
        idx_bw += [base + W]
        idx_ew += list(range(base + W + 1, base + 2 * W + 1))
        idx_aw += list(range(base + 2 * W + 1, base + 3 * W + 1))
    for j in range(R):
        base = wp + j * rp_size
        idx_kr += list(range(base, base + W))
        idx_br += [base + W]
    order = jnp.asarray(idx_kw + idx_bw + idx_ew + idx_aw + idx_kr + idx_br, jnp.int32)

    w_pg_t = params["w_pg"].T[:, order]                            # (H, P)
    b_pg = params["b_pg"][order].reshape(1, -1)                    # (1, P)
    w_heads = jnp.concatenate([params["w_out"].T, w_pg_t], axis=1)  # (H, O + P)
    b_heads = jnp.concatenate([params["b_out"].reshape(1, O), b_pg], axis=1)

    # Zero-pad the fused projection width to a multiple of 128 (lane-dense slab).
    pad = (-w_heads.shape[1]) % _LANE
    if pad:
        w_heads = jnp.pad(w_heads, ((0, 0), (0, pad)))
        b_heads = jnp.pad(b_heads, ((0, 0), (0, pad)))

    return dict(
        w_x=jnp.asarray(w_x, jnp.float32), w_r=jnp.asarray(w_r, jnp.float32),
        w_h=jnp.asarray(w_h, jnp.float32), b_lstm=jnp.asarray(b_lstm, jnp.float32),
        w_heads=jnp.asarray(w_heads, jnp.float32),
        b_heads=jnp.asarray(b_heads, jnp.float32),
    )


def ntm_forward_sequence(x_seq, read_vectors0, memory0, fused, *,
                         output_size, controller_size, word_size,
                         num_read_heads, num_write_heads):
    """Runs T sequential NTM forward steps in ONE pallas_call (grid = time)."""
    T, B, _ = x_seq.shape
    H, W, O = controller_size, word_size, output_size
    R, WH = num_read_heads, num_write_heads
    N = memory0.shape[0]
    I = x_seq.shape[-1]

    x_seq = jnp.asarray(x_seq, jnp.float32)
    r0 = jnp.asarray(read_vectors0, jnp.float32).reshape(R, W)
    mem0_t = jnp.asarray(memory0, jnp.float32).T              # (W, N), N on lanes

    inputs = [x_seq, r0, mem0_t,
              fused["w_x"], fused["w_r"], fused["w_h"], fused["b_lstm"],
              fused["w_heads"], fused["b_heads"]]

    def const_spec(a):
        nd = a.ndim
        return pl.BlockSpec(a.shape, lambda t, _nd=nd: (0,) * _nd)

    in_specs = ([pl.BlockSpec((None, B, I), lambda t: (t, 0, 0))]
                + [const_spec(a) for a in inputs[1:]])          # weights DMA'd once

    out_shapes = (jax.ShapeDtypeStruct((T, B + R, _LANE), jnp.float32),
                  jax.ShapeDtypeStruct((W, N), jnp.float32))
    out_specs = (pl.BlockSpec((None, B + R, _LANE), lambda t: (t, 0, 0)),
                 pl.BlockSpec((W, N), lambda t: (0, 0)))        # resident memory state

    kernel = functools.partial(ntm_kernel, H=H, O=O, W=W, WH=WH, R=R, B=B)
    slab, mem_t = pl.pallas_call(
        kernel,
        out_shape=out_shapes,
        grid=(T,),
        in_specs=in_specs,
        out_specs=out_specs,
        scratch_shapes=[pltpu.VMEM((B, H), jnp.float32),        # h
                        pltpu.VMEM((B, H), jnp.float32),        # c
                        pltpu.VMEM((R, W), jnp.float32)],       # read_vectors
        compiler_params=pltpu.CompilerParams(dimension_semantics=("arbitrary",)),
    )(*inputs)

    ctrl_seq = slab[:, :B, :O]                                   # (T, B, O)
    reads_seq = slab[:, B:, :W]                                  # (T, R, W)
    mem_out = mem_t.T                                            # back to torch (N, W)
    return ctrl_seq, reads_seq, mem_out


if __name__ == "__main__":
    # small config consistent with the module defaults (lstm controller, 1 rd / 1 wr head)
    input_size, output_size = 8, 8
    controller_size = 32
    memory_size, word_size = 16, 8
    R = WH = 1
    B, T = 2, 8

    key = jax.random.PRNGKey(0)
    kx, kp = jax.random.split(key)
    x_seq = jax.random.normal(kx, (T, B, input_size), jnp.float32)
    params = init_params(kp, input_size, output_size, controller_size,
                         word_size, R, WH)
    fused = fuse_params(params, input_size=input_size, output_size=output_size,
                        word_size=word_size, num_read_heads=R, num_write_heads=WH)

    memory0 = jnp.full((memory_size, word_size), 1e-6, jnp.float32)   # NTMMemory init
    read_vectors0 = jnp.zeros((R, word_size), jnp.float32)            # read_vectors buffer

    ctrl_seq, reads_seq, mem_out = ntm_forward_sequence(
        x_seq, read_vectors0, memory0, fused,
        output_size=output_size, controller_size=controller_size,
        word_size=word_size, num_read_heads=R, num_write_heads=WH)
    jax.block_until_ready((ctrl_seq, reads_seq, mem_out))

    assert ctrl_seq.shape == (T, B, output_size)
    assert reads_seq.shape == (T, R, word_size)
    assert mem_out.shape == (memory_size, word_size)
    assert bool(jnp.all(jnp.isfinite(ctrl_seq)))
    assert bool(jnp.all(jnp.isfinite(reads_seq)))
    assert bool(jnp.all(jnp.isfinite(mem_out)))
    print("KERNEL_OK")
</pallas_src>

<mosaic_0001>
module attributes {stable_mosaic.version = 11 : i64} {
  func.func @ntm_kernel(%arg0: i32, %arg1: memref<1x2x8xf32, #tpu.memory_space<vmem>>, %arg2: memref<1x8xf32, #tpu.memory_space<vmem>>, %arg3: memref<8x16xf32, #tpu.memory_space<vmem>>, %arg4: memref<8x128xf32, #tpu.memory_space<vmem>>, %arg5: memref<8x128xf32, #tpu.memory_space<vmem>>, %arg6: memref<32x128xf32, #tpu.memory_space<vmem>>, %arg7: memref<1x128xf32, #tpu.memory_space<vmem>>, %arg8: memref<32x128xf32, #tpu.memory_space<vmem>>, %arg9: memref<1x128xf32, #tpu.memory_space<vmem>>, %arg10: memref<1x3x128xf32, #tpu.memory_space<vmem>>, %arg11: memref<8x16xf32, #tpu.memory_space<vmem>>, %arg12: memref<2x32xf32, #tpu.memory_space<vmem>>, %arg13: memref<2x32xf32, #tpu.memory_space<vmem>>, %arg14: memref<1x8xf32, #tpu.memory_space<vmem>>) attributes {dimension_semantics = [#tpu.dimension_semantics<arbitrary>], iteration_bounds = array<i64: 8>, scalar_prefetch = 0 : i64, scratch_operands = 3 : i64, tpu.core_type = #tpu.core_type<tc>, window_params = [{transform_indices = @transform_0, window_bounds = array<i64: 1, 2, 8>}, {pipeline_mode = #tpu.pipeline_mode<synchronous>, transform_indices = @transform_1, window_bounds = array<i64: 1, 8>}, {pipeline_mode = #tpu.pipeline_mode<synchronous>, transform_indices = @transform_2, window_bounds = array<i64: 8, 16>}, {pipeline_mode = #tpu.pipeline_mode<synchronous>, transform_indices = @transform_3, window_bounds = array<i64: 8, 128>}, {pipeline_mode = #tpu.pipeline_mode<synchronous>, transform_indices = @transform_4, window_bounds = array<i64: 8, 128>}, {pipeline_mode = #tpu.pipeline_mode<synchronous>, transform_indices = @transform_5, window_bounds = array<i64: 32, 128>}, {pipeline_mode = #tpu.pipeline_mode<synchronous>, transform_indices = @transform_6, window_bounds = array<i64: 1, 128>}, {pipeline_mode = #tpu.pipeline_mode<synchronous>, transform_indices = @transform_7, window_bounds = array<i64: 32, 128>}, {pipeline_mode = #tpu.pipeline_mode<synchronous>, transform_indices = @transform_8, window_bounds = array<i64: 1, 128>}, {transform_indices = @transform_9, window_bounds = array<i64: 1, 3, 128>}, {pipeline_mode = #tpu.pipeline_mode<synchronous>, transform_indices = @transform_10, window_bounds = array<i64: 8, 16>}]} {
    %c0_i32 = arith.constant 0 : i32
    %0 = arith.cmpi eq, %arg0, %c0_i32 : i32
    %1 = arith.extui %0 : i1 to i32
    %c0_i32_0 = arith.constant 0 : i32
    %2 = arith.cmpi ne, %1, %c0_i32_0 : i32
    scf.if %2 {
      %cst_69 = arith.constant 0.000000e+00 : f32
      %221 = vector.broadcast %cst_69 : f32 to vector<2x32xf32>
      %c0_70 = arith.constant 0 : index
      %c0_71 = arith.constant 0 : index
      %222 = vector.load %arg12[%c0_70, %c0_71] : memref<2x32xf32, #tpu.memory_space<vmem>>, vector<2x32xf32>
      tpu.vector_store %arg12[%c0_70, %c0_71], %221 {strides = array<i32>} : memref<2x32xf32, #tpu.memory_space<vmem>>, vector<2x32xf32>,
      %cst_72 = arith.constant 0.000000e+00 : f32
      %223 = vector.broadcast %cst_72 : f32 to vector<2x32xf32>
      %c0_73 = arith.constant 0 : index
      %c0_74 = arith.constant 0 : index
      %224 = vector.load %arg13[%c0_73, %c0_74] : memref<2x32xf32, #tpu.memory_space<vmem>>, vector<2x32xf32>
      tpu.vector_store %arg13[%c0_73, %c0_74], %223 {strides = array<i32>} : memref<2x32xf32, #tpu.memory_space<vmem>>, vector<2x32xf32>,
      %c0_75 = arith.constant 0 : index
      %c0_76 = arith.constant 0 : index
      %225 = vector.load %arg2[%c0_75, %c0_76] : memref<1x8xf32, #tpu.memory_space<vmem>>, vector<1x8xf32>
      %c0_77 = arith.constant 0 : index
      %c0_78 = arith.constant 0 : index
      %226 = vector.load %arg14[%c0_77, %c0_78] : memref<1x8xf32, #tpu.memory_space<vmem>>, vector<1x8xf32>
      tpu.vector_store %arg14[%c0_77, %c0_78], %225 {strides = array<i32>} : memref<1x8xf32, #tpu.memory_space<vmem>>, vector<1x8xf32>,
      %c0_79 = arith.constant 0 : index
      %c0_80 = arith.constant 0 : index
      %227 = vector.load %arg3[%c0_79, %c0_80] : memref<8x16xf32, #tpu.memory_space<vmem>>, vector<8x16xf32>
      %c0_81 = arith.constant 0 : index
      %c0_82 = arith.constant 0 : index
      %228 = vector.load %arg11[%c0_81, %c0_82] : memref<8x16xf32, #tpu.memory_space<vmem>>, vector<8x16xf32>
      tpu.vector_store %arg11[%c0_81, %c0_82], %227 {strides = array<i32>} : memref<8x16xf32, #tpu.memory_space<vmem>>, vector<8x16xf32>,
    } else {
    }
    %c0 = arith.constant 0 : index
    %c0_1 = arith.constant 0 : index
    %c0_2 = arith.constant 0 : index
    %3 = vector.load %arg1[%c0, %c0_1, %c0_2] : memref<1x2x8xf32, #tpu.memory_space<vmem>>, vector<1x2x8xf32>
    %4 = vector.shape_cast %3 : vector<1x2x8xf32> to vector<2x8xf32>
    %c0_3 = arith.constant 0 : index
    %c0_4 = arith.constant 0 : index
    %5 = vector.load %arg12[%c0_3, %c0_4] : memref<2x32xf32, #tpu.memory_space<vmem>>, vector<2x32xf32>
    %c0_5 = arith.constant 0 : index
    %c0_6 = arith.constant 0 : index
    %6 = vector.load %arg13[%c0_5, %c0_6] : memref<2x32xf32, #tpu.memory_space<vmem>>, vector<2x32xf32>
    %c0_7 = arith.constant 0 : index
    %c0_8 = arith.constant 0 : index
    %7 = vector.load %arg14[%c0_7, %c0_8] : memref<1x8xf32, #tpu.memory_space<vmem>>, vector<1x8xf32>
    %c0_9 = arith.constant 0 : index
    %c0_10 = arith.constant 0 : index
    %8 = vector.load %arg4[%c0_9, %c0_10] : memref<8x128xf32, #tpu.memory_space<vmem>>, vector<8x128xf32>
    %cst = arith.constant dense<0.000000e+00> : vector<2x128xf32>
    %9 = tpu.matmul %4, %8, %cst {dimension_numbers = #tpu.dot_dimension_numbers<[1], [0], [0], [1], [0, 0, 1, 1], [], []>} : vector<2x8xf32>, vector<8x128xf32>, vector<2x128xf32> -> vector<2x128xf32>
    %c0_11 = arith.constant 0 : index
    %c0_12 = arith.constant 0 : index
    %10 = vector.load %arg5[%c0_11, %c0_12] : memref<8x128xf32, #tpu.memory_space<vmem>>, vector<8x128xf32>
    %cst_13 = arith.constant dense<0.000000e+00> : vector<1x128xf32>
    %11 = tpu.matmul %7, %10, %cst_13 {dimension_numbers = #tpu.dot_dimension_numbers<[1], [0], [0], [1], [0, 0, 1, 1], [], []>} : vector<1x8xf32>, vector<8x128xf32>, vector<1x128xf32> -> vector<1x128xf32>
    %12 = vector.broadcast %11 : vector<1x128xf32> to vector<2x128xf32>
    %13 = arith.addf %9, %12 : vector<2x128xf32>
    %c0_14 = arith.constant 0 : index
    %c0_15 = arith.constant 0 : index
    %14 = vector.load %arg6[%c0_14, %c0_15] : memref<32x128xf32, #tpu.memory_space<vmem>>, vector<32x128xf32>
    %cst_16 = arith.constant dense<0.000000e+00> : vector<2x128xf32>
    %15 = tpu.matmul %5, %14, %cst_16 {dimension_numbers = #tpu.dot_dimension_numbers<[1], [0], [0], [1], [0, 0, 1, 1], [], []>} : vector<2x32xf32>, vector<32x128xf32>, vector<2x128xf32> -> vector<2x128xf32>
    %16 = arith.addf %13, %15 : vector<2x128xf32>
    %c0_17 = arith.constant 0 : index
    %c0_18 = arith.constant 0 : index
    %17 = vector.load %arg7[%c0_17, %c0_18] : memref<1x128xf32, #tpu.memory_space<vmem>>, vector<1x128xf32>
    %18 = vector.broadcast %17 : vector<1x128xf32> to vector<2x128xf32>
    %19 = arith.addf %16, %18 : vector<2x128xf32>
    %20 = vector.extract_strided_slice %19 {offsets = [0, 0], sizes = [2, 32], strides = [1, 1]} : vector<2x128xf32> to vector<2x32xf32>
    %21 = arith.negf %20 : vector<2x32xf32>
    %22 = math.exp %21 : vector<2x32xf32>
    %cst_19 = arith.constant 1.000000e+00 : f32
    %23 = vector.broadcast %cst_19 : f32 to vector<2x32xf32>
    %24 = arith.addf %23, %22 : vector<2x32xf32>
    %25 = arith.divf %23, %24 : vector<2x32xf32>
    %26 = vector.extract_strided_slice %19 {offsets = [0, 32], sizes = [2, 32], strides = [1, 1]} : vector<2x128xf32> to vector<2x32xf32>
    %27 = arith.negf %26 : vector<2x32xf32>
    %28 = math.exp %27 : vector<2x32xf32>
    %cst_20 = arith.constant 1.000000e+00 : f32
    %29 = vector.broadcast %cst_20 : f32 to vector<2x32xf32>
    %30 = arith.addf %29, %28 : vector<2x32xf32>
    %31 = arith.divf %29, %30 : vector<2x32xf32>
    %32 = vector.extract_strided_slice %19 {offsets = [0, 64], sizes = [2, 32], strides = [1, 1]} : vector<2x128xf32> to vector<2x32xf32>
    %33 = math.tanh %32 : vector<2x32xf32>
    %34 = vector.extract_strided_slice %19 {offsets = [0, 96], sizes = [2, 32], strides = [1, 1]} : vector<2x128xf32> to vector<2x32xf32>
    %35 = arith.negf %34 : vector<2x32xf32>
    %36 = math.exp %35 : vector<2x32xf32>
    %cst_21 = arith.constant 1.000000e+00 : f32
    %37 = vector.broadcast %cst_21 : f32 to vector<2x32xf32>
    %38 = arith.addf %37, %36 : vector<2x32xf32>
    %39 = arith.divf %37, %38 : vector<2x32xf32>
    %40 = arith.mulf %31, %6 : vector<2x32xf32>
    %41 = arith.mulf %25, %33 : vector<2x32xf32>
    %42 = arith.addf %40, %41 : vector<2x32xf32>
    %43 = math.tanh %42 : vector<2x32xf32>
    %44 = arith.mulf %39, %43 : vector<2x32xf32>
    %c0_22 = arith.constant 0 : index
    %c0_23 = arith.constant 0 : index
    %45 = vector.load %arg12[%c0_22, %c0_23] : memref<2x32xf32, #tpu.memory_space<vmem>>, vector<2x32xf32>
    tpu.vector_store %arg12[%c0_22, %c0_23], %44 {strides = array<i32>} : memref<2x32xf32, #tpu.memory_space<vmem>>, vector<2x32xf32>,
    %c0_24 = arith.constant 0 : index
    %c0_25 = arith.constant 0 : index
    %46 = vector.load %arg13[%c0_24, %c0_25] : memref<2x32xf32, #tpu.memory_space<vmem>>, vector<2x32xf32>
    tpu.vector_store %arg13[%c0_24, %c0_25], %42 {strides = array<i32>} : memref<2x32xf32, #tpu.memory_space<vmem>>, vector<2x32xf32>,
    %c0_26 = arith.constant 0 : index
    %c0_27 = arith.constant 0 : index
    %47 = vector.load %arg8[%c0_26, %c0_27] : memref<32x128xf32, #tpu.memory_space<vmem>>, vector<32x128xf32>
    %cst_28 = arith.constant dense<0.000000e+00> : vector<2x128xf32>
    %48 = tpu.matmul %44, %47, %cst_28 {dimension_numbers = #tpu.dot_dimension_numbers<[1], [0], [0], [1], [0, 0, 1, 1], [], []>} : vector<2x32xf32>, vector<32x128xf32>, vector<2x128xf32> -> vector<2x128xf32>
    %c0_29 = arith.constant 0 : index
    %c0_30 = arith.constant 0 : index
    %49 = vector.load %arg9[%c0_29, %c0_30] : memref<1x128xf32, #tpu.memory_space<vmem>>, vector<1x128xf32>
    %50 = vector.broadcast %49 : vector<1x128xf32> to vector<2x128xf32>
    %51 = arith.addf %48, %50 : vector<2x128xf32>
    %52 = vector.extract_strided_slice %51 {offsets = [0, 0], sizes = [2, 8], strides = [1, 1]} : vector<2x128xf32> to vector<2x8xf32>
    %53 = vector.extract_strided_slice %51 {offsets = [0, 8], sizes = [2, 8], strides = [1, 1]} : vector<2x128xf32> to vector<2x8xf32>
    %54 = math.tanh %53 : vector<2x8xf32>
    %55 = vector.extract_strided_slice %51 {offsets = [0, 16], sizes = [2, 1], strides = [1, 1]} : vector<2x128xf32> to vector<2x1xf32>
    %cst_31 = arith.constant 0.000000e+00 : f32
    %56 = vector.broadcast %cst_31 : f32 to vector<2x1xf32>
    %57 = arith.maximumf %55, %56 : vector<2x1xf32>
    %58 = vector.broadcast %cst_31 : f32 to vector<2x1xf32>
    %59 = arith.subf %55, %58 : vector<2x1xf32>
    %60 = arith.cmpf one, %59, %59 : vector<2x1xf32>
    %61 = vector.broadcast %cst_31 : f32 to vector<2x1xf32>
    %62 = arith.addf %55, %61 : vector<2x1xf32>
    %63 = math.absf %59 : vector<2x1xf32>
    %cst_32 = arith.constant 0.000000e+00 : f32
    %64 = vector.broadcast %cst_32 : f32 to vector<2x1xf32>
    %65 = arith.subf %64, %63 : vector<2x1xf32>
    %66 = math.exp %65 : vector<2x1xf32>
    %67 = math.log1p %66 : vector<2x1xf32>
    %68 = arith.addf %57, %67 : vector<2x1xf32>
    %69 = arith.select %60, %62, %68 : vector<2x1xi1>, vector<2x1xf32>
    %70 = vector.extract_strided_slice %51 {offsets = [0, 17], sizes = [2, 8], strides = [1, 1]} : vector<2x128xf32> to vector<2x8xf32>
    %71 = arith.negf %70 : vector<2x8xf32>
    %72 = math.exp %71 : vector<2x8xf32>
    %cst_33 = arith.constant 1.000000e+00 : f32
    %73 = vector.broadcast %cst_33 : f32 to vector<2x8xf32>
    %74 = arith.addf %73, %72 : vector<2x8xf32>
    %75 = arith.divf %73, %74 : vector<2x8xf32>
    %76 = vector.extract_strided_slice %51 {offsets = [0, 25], sizes = [2, 8], strides = [1, 1]} : vector<2x128xf32> to vector<2x8xf32>
    %77 = math.tanh %76 : vector<2x8xf32>
    %78 = vector.extract_strided_slice %51 {offsets = [0, 33], sizes = [1, 8], strides = [1, 1]} : vector<2x128xf32> to vector<1x8xf32>
    %79 = math.tanh %78 : vector<1x8xf32>
    %80 = vector.extract_strided_slice %51 {offsets = [0, 41], sizes = [1, 1], strides = [1, 1]} : vector<2x128xf32> to vector<1x1xf32>
    %cst_34 = arith.constant 0.000000e+00 : f32
    %81 = vector.broadcast %cst_34 : f32 to vector<1x1xf32>
    %82 = arith.maximumf %80, %81 : vector<1x1xf32>
    %83 = vector.broadcast %cst_34 : f32 to vector<1x1xf32>
    %84 = arith.subf %80, %83 : vector<1x1xf32>
    %85 = arith.cmpf one, %84, %84 : vector<1x1xf32>
    %86 = vector.broadcast %cst_34 : f32 to vector<1x1xf32>
    %87 = arith.addf %80, %86 : vector<1x1xf32>
    %88 = math.absf %84 : vector<1x1xf32>
    %cst_35 = arith.constant 0.000000e+00 : f32
    %89 = vector.broadcast %cst_35 : f32 to vector<1x1xf32>
    %90 = arith.subf %89, %88 : vector<1x1xf32>
    %91 = math.exp %90 : vector<1x1xf32>
    %92 = math.log1p %91 : vector<1x1xf32>
    %93 = arith.addf %82, %92 : vector<1x1xf32>
    %94 = arith.select %85, %87, %93 : vector<1x1xi1>, vector<1x1xf32>
    %95 = arith.mulf %54, %54 : vector<2x8xf32>
    %cst_36 = arith.constant dense<0.000000e+00> : vector<2xf32>
    %96 = vector.multi_reduction <add>, %95, %cst_36 [1] : vector<2x8xf32> to vector<2xf32>
    %97 = vector.shape_cast %96 : vector<2xf32> to vector<2x1xf32>
    %98 = math.sqrt %97 : vector<2x1xf32>
    %cst_37 = arith.constant 9.99999993E-9 : f32
    %99 = vector.broadcast %cst_37 : f32 to vector<2x1xf32>
    %100 = arith.addf %98, %99 : vector<2x1xf32>
    %101 = tpu.reciprocal %100 : vector<2x1xf32> -> vector<2x1xf32>
    %102 = vector.broadcast %101 : vector<2x1xf32> to vector<2x8xf32>
    %103 = arith.mulf %54, %102 : vector<2x8xf32>
    %104 = vector.broadcast %69 : vector<2x1xf32> to vector<2x8xf32>
    %105 = arith.mulf %103, %104 : vector<2x8xf32>
    %106 = tpu.transpose %105, [1, 0] : vector<2x8xf32> -> vector<8x2xf32>
    %107 = tpu.transpose %75, [1, 0] : vector<2x8xf32> -> vector<8x2xf32>
    %108 = tpu.transpose %77, [1, 0] : vector<2x8xf32> -> vector<8x2xf32>
    %c0_38 = arith.constant 0 : index
    %c0_39 = arith.constant 0 : index
    %109 = vector.load %arg11[%c0_38, %c0_39] : memref<8x16xf32, #tpu.memory_space<vmem>>, vector<8x16xf32>
    %110 = arith.mulf %109, %109 : vector<8x16xf32>
    %cst_40 = arith.constant dense<0.000000e+00> : vector<16xf32>
    %111 = vector.multi_reduction <add>, %110, %cst_40 [0] : vector<8x16xf32> to vector<16xf32>
    %112 = vector.shape_cast %111 : vector<16xf32> to vector<1x16xf32>
    %113 = math.sqrt %112 : vector<1x16xf32>
    %cst_41 = arith.constant 9.99999993E-9 : f32
    %114 = vector.broadcast %cst_41 : f32 to vector<1x16xf32>
    %115 = arith.addf %113, %114 : vector<1x16xf32>
    %116 = tpu.reciprocal %115 : vector<1x16xf32> -> vector<1x16xf32>
    %117 = vector.extract_strided_slice %106 {offsets = [0, 0], sizes = [8, 1], strides = [1, 1]} : vector<8x2xf32> to vector<8x1xf32>
    %118 = vector.broadcast %117 : vector<8x1xf32> to vector<8x16xf32>
    %119 = arith.mulf %118, %109 : vector<8x16xf32>
    %cst_42 = arith.constant dense<0.000000e+00> : vector<16xf32>
    %120 = vector.multi_reduction <add>, %119, %cst_42 [0] : vector<8x16xf32> to vector<16xf32>
    %121 = vector.shape_cast %120 : vector<16xf32> to vector<1x16xf32>
    %122 = arith.mulf %121, %116 : vector<1x16xf32>
    %cst_43 = arith.constant dense<0xFF800000> : vector<1xf32>
    %123 = vector.multi_reduction <maximumf>, %122, %cst_43 [1] : vector<1x16xf32> to vector<1xf32>
    %124 = vector.shape_cast %123 : vector<1xf32> to vector<1x1xf32>
    %125 = vector.broadcast %124 : vector<1x1xf32> to vector<1x16xf32>
    %126 = arith.subf %122, %125 : vector<1x16xf32>
    %127 = math.exp %126 : vector<1x16xf32>
    %cst_44 = arith.constant dense<0.000000e+00> : vector<1xf32>
    %128 = vector.multi_reduction <add>, %127, %cst_44 [1] : vector<1x16xf32> to vector<1xf32>
    %129 = vector.shape_cast %128 : vector<1xf32> to vector<1x1xf32>
    %130 = tpu.reciprocal %129 : vector<1x1xf32> -> vector<1x1xf32>
    %131 = vector.broadcast %130 : vector<1x1xf32> to vector<1x16xf32>
    %132 = arith.mulf %127, %131 : vector<1x16xf32>
    %133 = vector.extract_strided_slice %107 {offsets = [0, 0], sizes = [8, 1], strides = [1, 1]} : vector<8x2xf32> to vector<8x1xf32>
    %134 = vector.broadcast %133 : vector<8x1xf32> to vector<8x16xf32>
    %135 = vector.broadcast %132 : vector<1x16xf32> to vector<8x16xf32>
    %136 = arith.mulf %134, %135 : vector<8x16xf32>
    %cst_45 = arith.constant 1.000000e+00 : f32
    %137 = vector.broadcast %cst_45 : f32 to vector<8x16xf32>
    %138 = arith.subf %137, %136 : vector<8x16xf32>
    %139 = arith.mulf %109, %138 : vector<8x16xf32>
    %140 = vector.extract_strided_slice %108 {offsets = [0, 0], sizes = [8, 1], strides = [1, 1]} : vector<8x2xf32> to vector<8x1xf32>
    %141 = vector.broadcast %140 : vector<8x1xf32> to vector<8x16xf32>
    %142 = vector.broadcast %132 : vector<1x16xf32> to vector<8x16xf32>
    %143 = arith.mulf %141, %142 : vector<8x16xf32>
    %144 = arith.addf %139, %143 : vector<8x16xf32>
    %145 = arith.mulf %144, %144 : vector<8x16xf32>
    %cst_46 = arith.constant dense<0.000000e+00> : vector<16xf32>
    %146 = vector.multi_reduction <add>, %145, %cst_46 [0] : vector<8x16xf32> to vector<16xf32>
    %147 = vector.shape_cast %146 : vector<16xf32> to vector<1x16xf32>
    %148 = math.sqrt %147 : vector<1x16xf32>
    %cst_47 = arith.constant 9.99999993E-9 : f32
    %149 = vector.broadcast %cst_47 : f32 to vector<1x16xf32>
    %150 = arith.addf %148, %149 : vector<1x16xf32>
    %151 = tpu.reciprocal %150 : vector<1x16xf32> -> vector<1x16xf32>
    %152 = vector.extract_strided_slice %106 {offsets = [0, 1], sizes = [8, 1], strides = [1, 1]} : vector<8x2xf32> to vector<8x1xf32>
    %153 = vector.broadcast %152 : vector<8x1xf32> to vector<8x16xf32>
    %154 = arith.mulf %153, %144 : vector<8x16xf32>
    %cst_48 = arith.constant dense<0.000000e+00> : vector<16xf32>
    %155 = vector.multi_reduction <add>, %154, %cst_48 [0] : vector<8x16xf32> to vector<16xf32>
    %156 = vector.shape_cast %155 : vector<16xf32> to vector<1x16xf32>
    %157 = arith.mulf %156, %151 : vector<1x16xf32>
    %cst_49 = arith.constant dense<0xFF800000> : vector<1xf32>
    %158 = vector.multi_reduction <maximumf>, %157, %cst_49 [1] : vector<1x16xf32> to vector<1xf32>
    %159 = vector.shape_cast %158 : vector<1xf32> to vector<1x1xf32>
    %160 = vector.broadcast %159 : vector<1x1xf32> to vector<1x16xf32>
    %161 = arith.subf %157, %160 : vector<1x16xf32>
    %162 = math.exp %161 : vector<1x16xf32>
    %cst_50 = arith.constant dense<0.000000e+00> : vector<1xf32>
    %163 = vector.multi_reduction <add>, %162, %cst_50 [1] : vector<1x16xf32> to vector<1xf32>
    %164 = vector.shape_cast %163 : vector<1xf32> to vector<1x1xf32>
    %165 = tpu.reciprocal %164 : vector<1x1xf32> -> vector<1x1xf32>
    %166 = vector.broadcast %165 : vector<1x1xf32> to vector<1x16xf32>
    %167 = arith.mulf %162, %166 : vector<1x16xf32>
    %168 = vector.extract_strided_slice %107 {offsets = [0, 1], sizes = [8, 1], strides = [1, 1]} : vector<8x2xf32> to vector<8x1xf32>
    %169 = vector.broadcast %168 : vector<8x1xf32> to vector<8x16xf32>
    %170 = vector.broadcast %167 : vector<1x16xf32> to vector<8x16xf32>
    %171 = arith.mulf %169, %170 : vector<8x16xf32>
    %cst_51 = arith.constant 1.000000e+00 : f32
    %172 = vector.broadcast %cst_51 : f32 to vector<8x16xf32>
    %173 = arith.subf %172, %171 : vector<8x16xf32>
    %174 = arith.mulf %144, %173 : vector<8x16xf32>
    %175 = vector.extract_strided_slice %108 {offsets = [0, 1], sizes = [8, 1], strides = [1, 1]} : vector<8x2xf32> to vector<8x1xf32>
    %176 = vector.broadcast %175 : vector<8x1xf32> to vector<8x16xf32>
    %177 = vector.broadcast %167 : vector<1x16xf32> to vector<8x16xf32>
    %178 = arith.mulf %176, %177 : vector<8x16xf32>
    %179 = arith.addf %174, %178 : vector<8x16xf32>
    %c0_52 = arith.constant 0 : index
    %c0_53 = arith.constant 0 : index
    %180 = vector.load %arg11[%c0_52, %c0_53] : memref<8x16xf32, #tpu.memory_space<vmem>>, vector<8x16xf32>
    tpu.vector_store %arg11[%c0_52, %c0_53], %179 {strides = array<i32>} : memref<8x16xf32, #tpu.memory_space<vmem>>, vector<8x16xf32>,
    %181 = arith.mulf %79, %79 : vector<1x8xf32>
    %cst_54 = arith.constant dense<0.000000e+00> : vector<1xf32>
    %182 = vector.multi_reduction <add>, %181, %cst_54 [1] : vector<1x8xf32> to vector<1xf32>
    %183 = vector.shape_cast %182 : vector<1xf32> to vector<1x1xf32>
    %184 = math.sqrt %183 : vector<1x1xf32>
    %cst_55 = arith.constant 9.99999993E-9 : f32
    %185 = vector.broadcast %cst_55 : f32 to vector<1x1xf32>
    %186 = arith.addf %184, %185 : vector<1x1xf32>
    %187 = tpu.reciprocal %186 : vector<1x1xf32> -> vector<1x1xf32>
    %188 = vector.broadcast %187 : vector<1x1xf32> to vector<1x8xf32>
    %189 = arith.mulf %79, %188 : vector<1x8xf32>
    %190 = vector.broadcast %94 : vector<1x1xf32> to vector<1x8xf32>
    %191 = arith.mulf %189, %190 : vector<1x8xf32>
    %192 = arith.mulf %179, %179 : vector<8x16xf32>
    %cst_56 = arith.constant dense<0.000000e+00> : vector<16xf32>
    %193 = vector.multi_reduction <add>, %192, %cst_56 [0] : vector<8x16xf32> to vector<16xf32>
    %194 = vector.shape_cast %193 : vector<16xf32> to vector<1x16xf32>
    %195 = math.sqrt %194 : vector<1x16xf32>
    %cst_57 = arith.constant 9.99999993E-9 : f32
    %196 = vector.broadcast %cst_57 : f32 to vector<1x16xf32>
    %197 = arith.addf %195, %196 : vector<1x16xf32>
    %198 = tpu.reciprocal %197 : vector<1x16xf32> -> vector<1x16xf32>
    %cst_58 = arith.constant dense<0.000000e+00> : vector<1x16xf32>
    %199 = tpu.matmul %191, %179, %cst_58 {dimension_numbers = #tpu.dot_dimension_numbers<[1], [0], [0], [1], [0, 0, 1, 1], [], []>} : vector<1x8xf32>, vector<8x16xf32>, vector<1x16xf32> -> vector<1x16xf32>
    %200 = arith.mulf %199, %198 : vector<1x16xf32>
    %cst_59 = arith.constant dense<0xFF800000> : vector<1xf32>
    %201 = vector.multi_reduction <maximumf>, %200, %cst_59 [1] : vector<1x16xf32> to vector<1xf32>
    %202 = vector.shape_cast %201 : vector<1xf32> to vector<1x1xf32>
    %203 = vector.broadcast %202 : vector<1x1xf32> to vector<1x16xf32>
    %204 = arith.subf %200, %203 : vector<1x16xf32>
    %205 = math.exp %204 : vector<1x16xf32>
    %cst_60 = arith.constant dense<0.000000e+00> : vector<1xf32>
    %206 = vector.multi_reduction <add>, %205, %cst_60 [1] : vector<1x16xf32> to vector<1xf32>
    %207 = vector.shape_cast %206 : vector<1xf32> to vector<1x1xf32>
    %208 = tpu.reciprocal %207 : vector<1x1xf32> -> vector<1x1xf32>
    %209 = vector.broadcast %208 : vector<1x1xf32> to vector<1x16xf32>
    %210 = arith.mulf %205, %209 : vector<1x16xf32>
    %cst_61 = arith.constant dense<0.000000e+00> : vector<1x8xf32>
    %211 = tpu.matmul %210, %179, %cst_61 {dimension_numbers = #tpu.dot_dimension_numbers<[1], [1], [0], [0], [0, 0, 1, 0], [], []>} : vector<1x16xf32>, vector<8x16xf32>, vector<1x8xf32> -> vector<1x8xf32>
    %c0_62 = arith.constant 0 : index
    %c0_63 = arith.constant 0 : index
    %212 = vector.load %arg14[%c0_62, %c0_63] : memref<1x8xf32, #tpu.memory_space<vmem>>, vector<1x8xf32>
    tpu.vector_store %arg14[%c0_62, %c0_63], %211 {strides = array<i32>} : memref<1x8xf32, #tpu.memory_space<vmem>>, vector<1x8xf32>,
    %cst_64 = arith.constant 0.000000e+00 : f32
    %213 = vector.broadcast %cst_64 : f32 to vector<2x120xf32>
    %214 = tpu.concatenate %52, %213 in 1 : vector<2x8xf32>, vector<2x120xf32> -> vector<2x128xf32>
    %cst_65 = arith.constant 0.000000e+00 : f32
    %215 = vector.broadcast %cst_65 : f32 to vector<1x120xf32>
    %216 = tpu.concatenate %211, %215 in 1 : vector<1x8xf32>, vector<1x120xf32> -> vector<1x128xf32>
    %217 = tpu.concatenate %214, %216 in 0 : vector<2x128xf32>, vector<1x128xf32> -> vector<3x128xf32>
    %c0_66 = arith.constant 0 : index
    %c0_67 = arith.constant 0 : index
    %c0_68 = arith.constant 0 : index
    %218 = vector.load %arg10[%c0_66, %c0_67, %c0_68] : memref<1x3x128xf32, #tpu.memory_space<vmem>>, vector<1x3x128xf32>
    %219 = vector.shape_cast %218 : vector<1x3x128xf32> to vector<3x128xf32>
    %220 = vector.shape_cast %217 : vector<3x128xf32> to vector<1x3x128xf32>
    tpu.vector_store %arg10[%c0_66, %c0_67, %c0_68], %220 {strides = array<i32>} : memref<1x3x128xf32, #tpu.memory_space<vmem>>, vector<1x3x128xf32>,
    return
  }
  func.func @transform_0(%arg0: i32) -> (i32, i32, i32) {
    %c0_i32 = arith.constant 0 : i32
    %c0_i32_0 = arith.constant 0 : i32
    %c0_i32_1 = arith.constant 0 : i32
    return %arg0, %c0_i32, %c0_i32_0 : i32, i32, i32
  }
  func.func @transform_1(%arg0: i32) -> (i32, i32) {
    %c0_i32 = arith.constant 0 : i32
    %c0_i32_0 = arith.constant 0 : i32
    %c0_i32_1 = arith.constant 0 : i32
    return %c0_i32, %c0_i32_0 : i32, i32
  }
  func.func @transform_2(%arg0: i32) -> (i32, i32) {
    %c0_i32 = arith.constant 0 : i32
    %c0_i32_0 = arith.constant 0 : i32
    %c0_i32_1 = arith.constant 0 : i32
    return %c0_i32, %c0_i32_0 : i32, i32
  }
  func.func @transform_3(%arg0: i32) -> (i32, i32) {
    %c0_i32 = arith.constant 0 : i32
    %c0_i32_0 = arith.constant 0 : i32
    %c0_i32_1 = arith.constant 0 : i32
    return %c0_i32, %c0_i32_0 : i32, i32
  }
  func.func @transform_4(%arg0: i32) -> (i32, i32) {
    %c0_i32 = arith.constant 0 : i32
    %c0_i32_0 = arith.constant 0 : i32
    %c0_i32_1 = arith.constant 0 : i32
    return %c0_i32, %c0_i32_0 : i32, i32
  }
  func.func @transform_5(%arg0: i32) -> (i32, i32) {
    %c0_i32 = arith.constant 0 : i32
    %c0_i32_0 = arith.constant 0 : i32
    %c0_i32_1 = arith.constant 0 : i32
    return %c0_i32, %c0_i32_0 : i32, i32
  }
  func.func @transform_6(%arg0: i32) -> (i32, i32) {
    %c0_i32 = arith.constant 0 : i32
    %c0_i32_0 = arith.constant 0 : i32
    %c0_i32_1 = arith.constant 0 : i32
    return %c0_i32, %c0_i32_0 : i32, i32
  }
  func.func @transform_7(%arg0: i32) -> (i32, i32) {
    %c0_i32 = arith.constant 0 : i32
    %c0_i32_0 = arith.constant 0 : i32
    %c0_i32_1 = arith.constant 0 : i32
    return %c0_i32, %c0_i32_0 : i32, i32
  }
  func.func @transform_8(%arg0: i32) -> (i32, i32) {
    %c0_i32 = arith.constant 0 : i32
    %c0_i32_0 = arith.constant 0 : i32
    %c0_i32_1 = arith.constant 0 : i32
    return %c0_i32, %c0_i32_0 : i32, i32
  }
  func.func @transform_9(%arg0: i32) -> (i32, i32, i32) {
    %c0_i32 = arith.constant 0 : i32
    %c0_i32_0 = arith.constant 0 : i32
    %c0_i32_1 = arith.constant 0 : i32
    return %arg0, %c0_i32, %c0_i32_0 : i32, i32, i32
  }
  func.func @transform_10(%arg0: i32) -> (i32, i32) {
    %c0_i32 = arith.constant 0 : i32
    %c0_i32_0 = arith.constant 0 : i32
    %c0_i32_1 = arith.constant 0 : i32
    return %c0_i32, %c0_i32_0 : i32, i32
  }
}

</mosaic_0001>

<llo_original>
// kernel: tpu_custom_call.1
$region0: #{tpu_custom_call.1}
  #allocation0 [shape = 'u32[]', space=smem, size = 0x4, offset = 0x4, fixed_abs, tag = 'smem constant byte address 0x4 - core index']
  #allocation1 [shape = 'u32[144,128]{1,0:T(1,128)}', space=vmem, size = 0x12000, scoped, tag = 'internal scratch']
  #allocation2 [shape = 'f32[2,32]{1,0:T(2,128)}', space=vmem, size = 0x400, scoped, tag = 'scratch operand']
  #allocation3 [shape = 'f32[2,32]{1,0:T(2,128)}', space=vmem, size = 0x400, scoped, tag = 'scratch operand']
  #allocation4 [shape = 'f32[1,8]{1,0:T(1,128)}', space=vmem, size = 0x200, scoped, tag = 'scratch operand']
  %s0 = inlined_call_operand.hbm [shape: f32[8,2,8], index: 0, kind: input, shape index: {}]
  %s1 = inlined_call_operand.vmem [shape: f32[1,8], index: 1, kind: input, shape index: {}]
  %s2 = inlined_call_operand.hbm [shape: f32[8,16], index: 2, kind: input, shape index: {}]
  %s3 = inlined_call_operand.hbm [shape: f32[8,128], index: 3, kind: input, shape index: {}]
  %s4 = inlined_call_operand.hbm [shape: f32[8,128], index: 4, kind: input, shape index: {}]
  %s5 = inlined_call_operand.hbm [shape: f32[32,128], index: 5, kind: input, shape index: {}]
  %s6 = inlined_call_operand.vmem [shape: f32[1,128], index: 6, kind: input, shape index: {}]
  %s7 = inlined_call_operand.hbm [shape: f32[32,128], index: 7, kind: input, shape index: {}]
  %s8 = inlined_call_operand.vmem [shape: f32[1,128], index: 8, kind: input, shape index: {}]
  %s9 = inlined_call_operand.vmem [shape: f32[8,3,128], index: 9, kind: output, shape index: {0}]
  %s10 = inlined_call_operand.hbm [shape: f32[8,16], index: 10, kind: output, shape index: {1}]
  %11 = xla_tuple %s9, %s10
  %s12 = sld [smem:[#allocation0]]
  $region105: #{tpu_custom_call.1} parent=0
    _
  %s14 = ssub.s32 1, %s12
  %s15 = scalar_select 0, %s14, %s12
  $region1: #{tpu_custom_call.1} parent=0
    #allocation5 [shape = 'u8[2048]{0}', space=vmem, size = 0x800, scoped, tag = 'input window, operand 0']
    #allocation6 [shape = 's32[2]{0}', space=sflag, size = 0x8, scoped, tag = 'scoped memory for tpu_custom_call.1']
    #allocation7 [shape = 's32[2]{0}', space=sflag, size = 0x8, scoped, tag = 'scoped memory for tpu_custom_call.1']
    #allocation8 [shape = 'u8[4096]{0}', space=vmem, size = 0x1000, scoped, tag = 'input window, operand 2, single buffered']
    #allocation9 [shape = 's32[1]{0}', space=sflag, size = 0x4, scoped, tag = 'scoped memory for tpu_custom_call.1']
    #allocation10 [shape = 'u8[4096]{0}', space=vmem, size = 0x1000, scoped, tag = 'input window, operand 3, single buffered']
    #allocation11 [shape = 'u8[4096]{0}', space=vmem, size = 0x1000, scoped, tag = 'input window, operand 4, single buffered']
    #allocation12 [shape = 's32[1]{0}', space=sflag, size = 0x4, scoped, tag = 'scoped memory for tpu_custom_call.1']
    #allocation13 [shape = 'u8[16384]{0}', space=vmem, size = 0x4000, scoped, tag = 'input window, operand 5, single buffered']
    #allocation14 [shape = 'u8[16384]{0}', space=vmem, size = 0x4000, scoped, tag = 'input window, operand 7, single buffered']
    #allocation15 [shape = 's32[1]{0}', space=sflag, size = 0x4, scoped, tag = 'scoped memory for tpu_custom_call.1']
    #allocation16 [shape = 'u8[4096]{0}', space=vmem, size = 0x1000, scoped, tag = 'output window, operand 1, single buffered']
    %16 = vsyncpa [#allocation6], 0
    %s17 = scalar_lea.sflag [#allocation6], 1
    %18 = vsyncpa %s17, 0
    %19 = vsyncpa [#allocation9], 0
    %20 = vsyncpa [#allocation12], 0
    %21 = vsyncpa [#allocation15], 0
    %22 = vsyncpa [#allocation7], 0
    loop: start=0, step=1, limit=10
    $region2: #{tpu_custom_call.1} parent=1 // loop_pre_header
      _
    $region3: #{tpu_custom_call.1} parent=1 // loop_header
      %s24 = sphi 0, %s28
      %p25 = scmp.ge.s32.totalorder %s24, 10
      %s34 = sphi 0, %s36
      %s37 = sphi 0, %s34
      %s38 = sphi 0, %s37
      %s54 = sphi 0, %s38
      %s58 = sphi 0, %s58
      %s60 = sphi 0, %s58
      %s61 = sphi 0, %s60
      %s75 = sphi 0, %s61
      %s79 = sphi 0, %s79
      %s81 = sphi 0, %s79
      %s82 = sphi 0, %s81
      %s96 = sphi 0, %s82
      %s100 = sphi 0, %s100
      %s102 = sphi 0, %s100
      %s103 = sphi 0, %s102
      %s117 = sphi 0, %s103
      %s121 = sphi 0, %s121
      %s123 = sphi 0, %s121
      %s124 = sphi 0, %s123
      %s138 = sphi 0, %s124
      %s142 = sphi 0, %s142
      %s144 = sphi 0, %s142
      %s145 = sphi 0, %s144
      %s159 = sphi 0, %s145
      %s163 = sphi 0, %s163
      %s165 = sphi 0, %s163
      %s166 = sphi 0, %s165
      %s180 = sphi 0, %s166
      %s184 = sphi 0, %s184
      %s186 = sphi 0, %s184
      %s187 = sphi 0, %s186
      %s201 = sphi 0, %s187
      %s205 = sphi 0, %s205
      %s207 = sphi 0, %s205
      %s208 = sphi 0, %s207
      %s222 = sphi 0, %s208
      %s228 = sphi 0, %s230
      %s231 = sphi 0, %s228
      %s232 = sphi 0, %s231
      %s248 = sphi 0, %s232
      %s252 = sphi 0, %s252
      %s254 = sphi 0, %s252
      %s255 = sphi 0, %s254
      %s269 = sphi 0, %s255
    $region4: #{tpu_custom_call.1} parent=1 // loop_header_branch
      %27 = sbr.rel (%p25) target = $region8
    $region5: #{tpu_custom_call.1} parent=1 // loop_body
      %s29 = ssub.s32 %s24, 1
      %s30 = ssub.s32 %s24, 2
      %s31 = sadd.s32 %s24, 1
      %s32 = ssub.s32 %s24, %s31
      %p33 = scmp.eq.s32.totalorder %s32, 0
      %s35 = sadd.s32 %s34, 1
      %s36 = scalar_select %p33, %s34, %s35
      %p39 = pneg %p33
      %p40 = scmp.eq.s32.totalorder %s24, 7
      %p41 = por %p39, %p40
      %p42 = scmp.ne.s32.totalorder %s34, %s37
      %p43 = scmp.eq.s32.totalorder %s24, 0
      %p44 = por %p42, %p43
      %p45 = scmp.ne.s32.totalorder %s34, %s37
      %p46 = scmp.eq.s32.totalorder %s29, 7
      %p47 = por %p45, %p46
      %p48 = scmp.ne.s32.totalorder %s37, %s38
      %p49 = scmp.eq.s32.totalorder %s29, 0
      %p50 = por %p48, %p49
      %p51 = scmp.ne.s32.totalorder %s37, %s38
      %p52 = scmp.eq.s32.totalorder %s30, 7
      %p53 = por %p51, %p52
      %p55 = scmp.ne.s32.totalorder %s38, %s54
      %p56 = scmp.eq.s32.totalorder %s30, 0
      %p57 = por %p55, %p56
      %s59 = sadd.s32 %s58, 1
      %p62 = scmp.eq.s32.totalorder %s24, 7
      %p63 = scmp.ne.s32.totalorder %s58, %s60
      %p64 = scmp.eq.s32.totalorder %s24, 0
      %p65 = por %p63, %p64
      %p66 = scmp.ne.s32.totalorder %s58, %s60
      %p67 = scmp.eq.s32.totalorder %s29, 7
      %p68 = por %p66, %p67
      %p69 = scmp.ne.s32.totalorder %s60, %s61
      %p70 = scmp.eq.s32.totalorder %s29, 0
      %p71 = por %p69, %p70
      %p72 = scmp.ne.s32.totalorder %s60, %s61
      %p73 = scmp.eq.s32.totalorder %s30, 7
      %p74 = por %p72, %p73
      %p76 = scmp.ne.s32.totalorder %s61, %s75
      %p77 = scmp.eq.s32.totalorder %s30, 0
      %p78 = por %p76, %p77
      %s80 = sadd.s32 %s79, 1
      %p83 = scmp.eq.s32.totalorder %s24, 7
      %p84 = scmp.ne.s32.totalorder %s79, %s81
      %p85 = scmp.eq.s32.totalorder %s24, 0
      %p86 = por %p84, %p85
      %p87 = scmp.ne.s32.totalorder %s79, %s81
      %p88 = scmp.eq.s32.totalorder %s29, 7
      %p89 = por %p87, %p88
      %p90 = scmp.ne.s32.totalorder %s81, %s82
      %p91 = scmp.eq.s32.totalorder %s29, 0
      %p92 = por %p90, %p91
      %p93 = scmp.ne.s32.totalorder %s81, %s82
      %p94 = scmp.eq.s32.totalorder %s30, 7
      %p95 = por %p93, %p94
      %p97 = scmp.ne.s32.totalorder %s82, %s96
      %p98 = scmp.eq.s32.totalorder %s30, 0
      %p99 = por %p97, %p98
      %s101 = sadd.s32 %s100, 1
      %p104 = scmp.eq.s32.totalorder %s24, 7
      %p105 = scmp.ne.s32.totalorder %s100, %s102
      %p106 = scmp.eq.s32.totalorder %s24, 0
      %p107 = por %p105, %p106
      %p108 = scmp.ne.s32.totalorder %s100, %s102
      %p109 = scmp.eq.s32.totalorder %s29, 7
      %p110 = por %p108, %p109
      %p111 = scmp.ne.s32.totalorder %s102, %s103
      %p112 = scmp.eq.s32.totalorder %s29, 0
      %p113 = por %p111, %p112
      %p114 = scmp.ne.s32.totalorder %s102, %s103
      %p115 = scmp.eq.s32.totalorder %s30, 7
      %p116 = por %p114, %p115
      %p118 = scmp.ne.s32.totalorder %s103, %s117
      %p119 = scmp.eq.s32.totalorder %s30, 0
      %p120 = por %p118, %p119
      %s122 = sadd.s32 %s121, 1
      %p125 = scmp.eq.s32.totalorder %s24, 7
      %p126 = scmp.ne.s32.totalorder %s121, %s123
      %p127 = scmp.eq.s32.totalorder %s24, 0
      %p128 = por %p126, %p127
      %p129 = scmp.ne.s32.totalorder %s121, %s123
      %p130 = scmp.eq.s32.totalorder %s29, 7
      %p131 = por %p129, %p130
      %p132 = scmp.ne.s32.totalorder %s123, %s124
      %p133 = scmp.eq.s32.totalorder %s29, 0
      %p134 = por %p132, %p133
      %p135 = scmp.ne.s32.totalorder %s123, %s124
      %p136 = scmp.eq.s32.totalorder %s30, 7
      %p137 = por %p135, %p136
      %p139 = scmp.ne.s32.totalorder %s124, %s138
      %p140 = scmp.eq.s32.totalorder %s30, 0
      %p141 = por %p139, %p140
      %s143 = sadd.s32 %s142, 1
      %p146 = scmp.eq.s32.totalorder %s24, 7
      %p147 = scmp.ne.s32.totalorder %s142, %s144
      %p148 = scmp.eq.s32.totalorder %s24, 0
      %p149 = por %p147, %p148
      %p150 = scmp.ne.s32.totalorder %s142, %s144
      %p151 = scmp.eq.s32.totalorder %s29, 7
      %p152 = por %p150, %p151
      %p153 = scmp.ne.s32.totalorder %s144, %s145
      %p154 = scmp.eq.s32.totalorder %s29, 0
      %p155 = por %p153, %p154
      %p156 = scmp.ne.s32.totalorder %s144, %s145
      %p157 = scmp.eq.s32.totalorder %s30, 7
      %p158 = por %p156, %p157
      %p160 = scmp.ne.s32.totalorder %s145, %s159
      %p161 = scmp.eq.s32.totalorder %s30, 0
      %p162 = por %p160, %p161
      %s164 = sadd.s32 %s163, 1
      %p167 = scmp.eq.s32.totalorder %s24, 7
      %p168 = scmp.ne.s32.totalorder %s163, %s165
      %p169 = scmp.eq.s32.totalorder %s24, 0
      %p170 = por %p168, %p169
      %p171 = scmp.ne.s32.totalorder %s163, %s165
      %p172 = scmp.eq.s32.totalorder %s29, 7
      %p173 = por %p171, %p172
      %p174 = scmp.ne.s32.totalorder %s165, %s166
      %p175 = scmp.eq.s32.totalorder %s29, 0
      %p176 = por %p174, %p175
      %p177 = scmp.ne.s32.totalorder %s165, %s166
      %p178 = scmp.eq.s32.totalorder %s30, 7
      %p179 = por %p177, %p178
      %p181 = scmp.ne.s32.totalorder %s166, %s180
      %p182 = scmp.eq.s32.totalorder %s30, 0
      %p183 = por %p181, %p182
      %s185 = sadd.s32 %s184, 1
      %p188 = scmp.eq.s32.totalorder %s24, 7
      %p189 = scmp.ne.s32.totalorder %s184, %s186
      %p190 = scmp.eq.s32.totalorder %s24, 0
      %p191 = por %p189, %p190
      %p192 = scmp.ne.s32.totalorder %s184, %s186
      %p193 = scmp.eq.s32.totalorder %s29, 7
      %p194 = por %p192, %p193
      %p195 = scmp.ne.s32.totalorder %s186, %s187
      %p196 = scmp.eq.s32.totalorder %s29, 0
      %p197 = por %p195, %p196
      %p198 = scmp.ne.s32.totalorder %s186, %s187
      %p199 = scmp.eq.s32.totalorder %s30, 7
      %p200 = por %p198, %p199
      %p202 = scmp.ne.s32.totalorder %s187, %s201
      %p203 = scmp.eq.s32.totalorder %s30, 0
      %p204 = por %p202, %p203
      %s206 = sadd.s32 %s205, 1
      %p209 = scmp.eq.s32.totalorder %s24, 7
      %p210 = scmp.ne.s32.totalorder %s205, %s207
      %p211 = scmp.eq.s32.totalorder %s24, 0
      %p212 = por %p210, %p211
      %p213 = scmp.ne.s32.totalorder %s205, %s207
      %p214 = scmp.eq.s32.totalorder %s29, 7
      %p215 = por %p213, %p214
      %p216 = scmp.ne.s32.totalorder %s207, %s208
      %p217 = scmp.eq.s32.totalorder %s29, 0
      %p218 = por %p216, %p217
      %p219 = scmp.ne.s32.totalorder %s207, %s208
      %p220 = scmp.eq.s32.totalorder %s30, 7
      %p221 = por %p219, %p220
      %p223 = scmp.ne.s32.totalorder %s208, %s222
      %p224 = scmp.eq.s32.totalorder %s30, 0
      %p225 = por %p223, %p224
      %s226 = ssub.s32 %s24, %s31
      %p227 = scmp.eq.s32.totalorder %s226, 0
      %s229 = sadd.s32 %s228, 1
      %s230 = scalar_select %p227, %s228, %s229
      %p233 = pneg %p227
      %p234 = scmp.eq.s32.totalorder %s24, 7
      %p235 = por %p233, %p234
      %p236 = scmp.ne.s32.totalorder %s228, %s231
      %p237 = scmp.eq.s32.totalorder %s24, 0
      %p238 = por %p236, %p237
      %p239 = scmp.ne.s32.totalorder %s228, %s231
      %p240 = scmp.eq.s32.totalorder %s29, 7
      %p241 = por %p239, %p240
      %p242 = scmp.ne.s32.totalorder %s231, %s232
      %p243 = scmp.eq.s32.totalorder %s29, 0
      %p244 = por %p242, %p243
      %p245 = scmp.ne.s32.totalorder %s231, %s232
      %p246 = scmp.eq.s32.totalorder %s30, 7
      %p247 = por %p245, %p246
      %p249 = scmp.ne.s32.totalorder %s232, %s248
      %p250 = scmp.eq.s32.totalorder %s30, 0
      %p251 = por %p249, %p250
      %s253 = sadd.s32 %s252, 1
      %p256 = scmp.eq.s32.totalorder %s24, 7
      %p257 = scmp.ne.s32.totalorder %s252, %s254
      %p258 = scmp.eq.s32.totalorder %s24, 0
      %p259 = por %p257, %p258
      %p260 = scmp.ne.s32.totalorder %s252, %s254
      %p261 = scmp.eq.s32.totalorder %s29, 7
      %p262 = por %p260, %p261
      %p263 = scmp.ne.s32.totalorder %s254, %s255
      %p264 = scmp.eq.s32.totalorder %s29, 0
      %p265 = por %p263, %p264
      %p266 = scmp.ne.s32.totalorder %s254, %s255
      %p267 = scmp.eq.s32.totalorder %s30, 7
      %p268 = por %p266, %p267
      %p270 = scmp.ne.s32.totalorder %s255, %s269
      %p271 = scmp.eq.s32.totalorder %s30, 0
      %p272 = por %p270, %p271
      %p273 = scmp.le.s32.totalorder 1, %s24
      %p274 = scmp.lt.s32.totalorder %s24, 9
      %p275 = pnand %p273, %p274
      %p276 = pneg %p275
      // Predicated region
      $region9: #{tpu_custom_call.1} parent=5 // pred_check
        _
      $region10: #{tpu_custom_call.1} parent=5 // pred_check_branch
        %278 = sbr.rel (%p275) target = $region12
      $region11: #{tpu_custom_call.1} parent=5 // pred_region
        %s279 = ssub.s32 %s24, 1
        // Predicated region
        $region13: #{tpu_custom_call.1} parent=11 // pred_check
          %p280 = pneg %p71
        $region14: #{tpu_custom_call.1} parent=11 // pred_check_branch
          %282 = sbr.rel (%p280) target = $region16
        $region15: #{tpu_custom_call.1} parent=11 // pred_region
          _
        $region16: #{tpu_custom_call.1} parent=11 // pred_fallthru
          _
        // Predicated region
        $region17: #{tpu_custom_call.1} parent=11 // pred_check
          %p283 = pneg %p92
        $region18: #{tpu_custom_call.1} parent=11 // pred_check_branch
          %285 = sbr.rel (%p283) target = $region20
        $region19: #{tpu_custom_call.1} parent=11 // pred_region
          %s287 = ssub.s32 128, 128
          %288 = vsyncadd [#allocation9], %s287
          %s290 = sshll.u32 [#allocation8], 4
          %s291 = int_to_ptr.vmem [resolvable:$true] %s290
          %293 = dma.hbm_to_vmem [thread:$0]  %s2, 128, %s291, [#allocation9]
        $region20: #{tpu_custom_call.1} parent=11 // pred_fallthru
          _
        // Predicated region
        $region21: #{tpu_custom_call.1} parent=11 // pred_check
          %p294 = pneg %p113
        $region22: #{tpu_custom_call.1} parent=11 // pred_check_branch
          %296 = sbr.rel (%p294) target = $region24
        $region23: #{tpu_custom_call.1} parent=11 // pred_region
          %s298 = ssub.s32 128, 128
          %299 = vsyncadd [#allocation9], %s298
          %s301 = sshll.u32 [#allocation10], 4
          %s302 = int_to_ptr.vmem [resolvable:$true] %s301
          %304 = dma.hbm_to_vmem [thread:$0]  %s3, 128, %s302, [#allocation9]
        $region24: #{tpu_custom_call.1} parent=11 // pred_fallthru
          _
        // Predicated region
        $region25: #{tpu_custom_call.1} parent=11 // pred_check
          %p305 = pneg %p134
        $region26: #{tpu_custom_call.1} parent=11 // pred_check_branch
          %307 = sbr.rel (%p305) target = $region28
        $region27: #{tpu_custom_call.1} parent=11 // pred_region
          %s309 = ssub.s32 128, 128
          %310 = vsyncadd [#allocation12], %s309
          %s312 = sshll.u32 [#allocation11], 4
          %s313 = int_to_ptr.vmem [resolvable:$true] %s312
          %315 = dma.hbm_to_vmem [thread:$0]  %s4, 128, %s313, [#allocation12]
        $region28: #{tpu_custom_call.1} parent=11 // pred_fallthru
          _
        // Predicated region
        $region29: #{tpu_custom_call.1} parent=11 // pred_check
          %p316 = pneg %p155
        $region30: #{tpu_custom_call.1} parent=11 // pred_check_branch
          %318 = sbr.rel (%p316) target = $region32
        $region31: #{tpu_custom_call.1} parent=11 // pred_region
          %s320 = ssub.s32 512, 512
          %321 = vsyncadd [#allocation12], %s320
          %s322 = sshll.u32 [#allocation13], 4
          %s323 = int_to_ptr.vmem [resolvable:$true] %s322
          %328 = dma.hbm_to_vmem [thread:$0]  %s5, 512, %s323, [#allocation12], 128, 128, 8
        $region32: #{tpu_custom_call.1} parent=11 // pred_fallthru
          _
        // Predicated region
        $region33: #{tpu_custom_call.1} parent=11 // pred_check
          %p329 = pneg %p176
        $region34: #{tpu_custom_call.1} parent=11 // pred_check_branch
          %331 = sbr.rel (%p329) target = $region36
        $region35: #{tpu_custom_call.1} parent=11 // pred_region
          _
        $region36: #{tpu_custom_call.1} parent=11 // pred_fallthru
          _
        // Predicated region
        $region37: #{tpu_custom_call.1} parent=11 // pred_check
          %p332 = pneg %p197
        $region38: #{tpu_custom_call.1} parent=11 // pred_check_branch
          %334 = sbr.rel (%p332) target = $region40
        $region39: #{tpu_custom_call.1} parent=11 // pred_region
          %s336 = ssub.s32 512, 512
          %337 = vsyncadd [#allocation15], %s336
          %s338 = sshll.u32 [#allocation14], 4
          %s339 = int_to_ptr.vmem [resolvable:$true] %s338
          %344 = dma.hbm_to_vmem [thread:$0]  %s7, 512, %s339, [#allocation15], 128, 128, 8
        $region40: #{tpu_custom_call.1} parent=11 // pred_fallthru
          _
        // Predicated region
        $region41: #{tpu_custom_call.1} parent=11 // pred_check
          %p345 = pneg %p218
        $region42: #{tpu_custom_call.1} parent=11 // pred_check_branch
          %347 = sbr.rel (%p345) target = $region44
        $region43: #{tpu_custom_call.1} parent=11 // pred_region
          _
        $region44: #{tpu_custom_call.1} parent=11 // pred_fallthru
          _
      $region12: #{tpu_custom_call.1} parent=5 // pred_fallthru
        _
      %p348 = scmp.lt.s32.totalorder %s24, 8
      // Predicated region
      $region45: #{tpu_custom_call.1} parent=5 // pred_check
        %p349 = pneg %p348
      $region46: #{tpu_custom_call.1} parent=5 // pred_check_branch
        %351 = sbr.rel (%p349) target = $region48
      $region47: #{tpu_custom_call.1} parent=5 // pred_region
        // Predicated region
        $region49: #{tpu_custom_call.1} parent=47 // pred_check
          %p352 = pneg %p44
        $region50: #{tpu_custom_call.1} parent=47 // pred_check_branch
          %354 = sbr.rel (%p352) target = $region52
        $region51: #{tpu_custom_call.1} parent=47 // pred_region
          %s355 = sand.u32 %s34, 1
          %s356 = scalar_lea.sflag [#allocation6], %s355
          %s357 = sand.u32 %s34, 1
          %s358 = smul.addr %s357, 2
          %s359 = scalar_lea.vmem [#allocation5], %s358
          %s361 = ssub.s32 32, 32
          %362 = vsyncadd %s356, %s361
          %s363 = smul.addr %s24, 32
          %s364 = scalar_lea.hbm %s0, %s363
          %s366 = sshll.u32 %s359, 4
          %s367 = int_to_ptr.vmem [resolvable:$true] %s366
          %369 = dma.hbm_to_vmem [thread:$0]  %s364, 32, %s367, %s356
        $region52: #{tpu_custom_call.1} parent=47 // pred_fallthru
          _
      $region48: #{tpu_custom_call.1} parent=5 // pred_fallthru
        _
      %p370 = scmp.le.s32.totalorder 1, %s24
      %p371 = scmp.lt.s32.totalorder %s24, 9
      %p372 = pnand %p370, %p371
      %p373 = pneg %p372
      // Predicated region
      $region53: #{tpu_custom_call.1} parent=5 // pred_check
        _
      $region54: #{tpu_custom_call.1} parent=5 // pred_check_branch
        %375 = sbr.rel (%p372) target = $region56
      $region55: #{tpu_custom_call.1} parent=5 // pred_region
        %s376 = ssub.s32 %s24, 1
        %s377 = sand.u32 %s37, 1
        %s378 = scalar_lea.sflag [#allocation6], %s377
        %s379 = sand.u32 %s37, 1
        %s380 = smul.addr %s379, 2
        %s381 = scalar_lea.vmem [#allocation5], %s380
        // Predicated region
        $region57: #{tpu_custom_call.1} parent=55 // pred_check
          %p382 = pneg %p50
        $region58: #{tpu_custom_call.1} parent=55 // pred_check_branch
          %384 = sbr.rel (%p382) target = $region60
        $region59: #{tpu_custom_call.1} parent=55 // pred_region
          %385 = dma.done %s378, 32
        $region60: #{tpu_custom_call.1} parent=55 // pred_fallthru
          _
        // Predicated region
        $region61: #{tpu_custom_call.1} parent=55 // pred_check
          %p386 = pneg %p92
        $region62: #{tpu_custom_call.1} parent=55 // pred_check_branch
          %388 = sbr.rel (%p386) target = $region64
        $region63: #{tpu_custom_call.1} parent=55 // pred_region
          %389 = dma.done [#allocation9], 128
        $region64: #{tpu_custom_call.1} parent=55 // pred_fallthru
          _
        // Predicated region
        $region65: #{tpu_custom_call.1} parent=55 // pred_check
          %p390 = pneg %p113
        $region66: #{tpu_custom_call.1} parent=55 // pred_check_branch
          %392 = sbr.rel (%p390) target = $region68
        $region67: #{tpu_custom_call.1} parent=55 // pred_region
          %393 = dma.done [#allocation9], 128
        $region68: #{tpu_custom_call.1} parent=55 // pred_fallthru
          _
        // Predicated region
        $region69: #{tpu_custom_call.1} parent=55 // pred_check
          %p394 = pneg %p134
        $region70: #{tpu_custom_call.1} parent=55 // pred_check_branch
          %396 = sbr.rel (%p394) target = $region72
        $region71: #{tpu_custom_call.1} parent=55 // pred_region
          %397 = dma.done [#allocation12], 128
        $region72: #{tpu_custom_call.1} parent=55 // pred_fallthru
          _
        // Predicated region
        $region73: #{tpu_custom_call.1} parent=55 // pred_check
          %p398 = pneg %p155
        $region74: #{tpu_custom_call.1} parent=55 // pred_check_branch
          %400 = sbr.rel (%p398) target = $region76
        $region75: #{tpu_custom_call.1} parent=55 // pred_region
          %401 = dma.done [#allocation12], 512
        $region76: #{tpu_custom_call.1} parent=55 // pred_fallthru
          _
        // Predicated region
        $region77: #{tpu_custom_call.1} parent=55 // pred_check
          %p402 = pneg %p197
        $region78: #{tpu_custom_call.1} parent=55 // pred_check_branch
          %404 = sbr.rel (%p402) target = $region80
        $region79: #{tpu_custom_call.1} parent=55 // pred_region
          %405 = dma.done [#allocation15], 512
        $region80: #{tpu_custom_call.1} parent=55 // pred_fallthru
          _
        %s406 = sand.u32 %s37, 1
        %s407 = scalar_lea.sflag [#allocation6], %s406
        %s408 = sand.u32 %s37, 1
        %s409 = smul.addr %s408, 2
        %s410 = scalar_lea.vmem [#allocation5], %s409
        %p411 = pneg %p50
        %p412 = pneg %p47
        %p413 = pneg %p71
        %p414 = pneg %p68
        %p415 = pneg %p92
        %p416 = pneg %p89
        %p417 = pneg %p113
        %p418 = pneg %p110
        %p419 = pneg %p134
        %p420 = pneg %p131
        %p421 = pneg %p155
        %p422 = pneg %p152
        %p423 = pneg %p176
        %p424 = pneg %p173
        %p425 = pneg %p197
        %p426 = pneg %p194
        %p427 = pneg %p218
        %p428 = pneg %p215
        %p429 = pneg %p244
        %p430 = pneg %p241
        %p431 = scmp.lt.s32.totalorder %s29, 7
        %s432 = scalar_select %p431, %s29, 7
        %s433 = smul.addr %s432, 4
        %s434 = scalar_lea.vmem %s9, %s433
        %p435 = pneg %p265
        %p436 = pneg %p262
        %p437 = scmp.lt.s32.totalorder %s29, 7
        %s438 = scalar_select %p437, %s29, 7
        %s439 = smul.addr %s438, 4
        %s440 = scalar_lea.vmem %s9, %s439
        %p441 = scmp.eq.s32.totalorder %s29, 0
        // Predicated region
        $region81: #{tpu_custom_call.1} parent=55 // pred_check
          %p442 = pneg %p441
        $region82: #{tpu_custom_call.1} parent=55 // pred_check_branch
          %444 = sbr.rel (%p442) target = $region84
        $region83: #{tpu_custom_call.1} parent=55 // pred_region
          %vm445 = vcmask 254976
          %446 = vst.msk [vmem:[#allocation2] sm:$0x3] %vm445, 0.0
          %447 = vst.msk [vmem:[#allocation3] sm:$0x3] %vm445, 0.0
          %v448 = vld [vmem:[%s1] sm:$0x1]
          %vm449 = vcmask 57344
          %450 = vst.msk [vmem:[#allocation4] sm:$0x1] %vm449, %v448
          %v451 = vld [vmem:[#allocation8] sm:$0xff]
          %vm452 = vcmask 130048
          %453 = vst.msk [vmem:[#allocation16] sm:$0xff] %vm452, %v451
        $region84: #{tpu_custom_call.1} parent=55 // pred_fallthru
          _
        %v454 = vld [vmem:[%s381] sm:$0x3]
        %v455 = vld [vmem:[#allocation2] sm:$0x3]
        %v456 = vld [vmem:[#allocation3] sm:$0x3]
        %v457 = vld [vmem:[#allocation4] sm:$0x1]
        %v458 = vld [vmem:[#allocation10] sm:$0xff]
        %v459 = vld [vmem:[#allocation11] sm:$0xff]
        %vm460 = vcmask 64512
        %v462 = vsel %vm460, %v457, 0
        %464 = vmatprep.subr.mxu0 0.0
        %465 = vmatpush1.msra.mxu0 0.0
        %466 = vmatprep.subr.mxu0 0.0
        %467 = vmatpush1.msra.mxu0 0.0
        %468 = vmatprep.subr.mxu0 0.0
        %469 = vmatpush1.msra.mxu0 0.0
        %470 = vmatprep.subr.mxu0 0.0
        %471 = vmatpush1.msra.mxu0 0.0
        %472 = vmatprep.subr.mxu0 0.0
        %473 = vmatpush1.msra.mxu0 0.0
        %474 = vmatprep.subr.mxu0 0.0
        %475 = vmatpush1.msra.mxu0 0.0
        %476 = vmatprep.subr.mxu0 0.0
        %477 = vmatpush1.msra.mxu0 0.0
        %478 = vmatprep.subr.mxu0 0.0
        %479 = vmatpush1.msra.mxu0 0.0
        %480 = vmatprep.subr.mxu0 0.0
        %481 = vmatpush1.msra.mxu0 0.0
        %482 = vmatprep.subr.mxu0 0.0
        %483 = vmatpush1.msra.mxu0 0.0
        %484 = vmatprep.subr.mxu0 0.0
        %485 = vmatpush1.msra.mxu0 0.0
        %486 = vmatprep.subr.mxu0 0.0
        %487 = vmatpush1.msra.mxu0 0.0
        %488 = vmatprep.subr.mxu0 0.0
        %489 = vmatpush1.msra.mxu0 0.0
        %490 = vmatprep.subr.mxu0 0.0
        %491 = vmatpush1.msra.mxu0 0.0
        %492 = vmatprep.subr.mxu0 0.0
        %493 = vmatpush1.msra.mxu0 0.0
        %494 = vmatprep.subr.mxu0 0.0
        %495 = vmatpush1.msra.mxu0 %v459
        %496 = vmatprep.subr.mxu0 0.0
        %497 = vmatpush2.msra.mxu0 0.0
        %498 = vmatprep.subr.mxu0 0.0
        %499 = vmatpush2.msra.mxu0 0.0
        %500 = vmatprep.subr.mxu0 0.0
        %501 = vmatpush2.msra.mxu0 0.0
        %502 = vmatprep.subr.mxu0 0.0
        %503 = vmatpush2.msra.mxu0 0.0
        %504 = vmatprep.subr.mxu0 0.0
        %505 = vmatpush2.msra.mxu0 0.0
        %506 = vmatprep.subr.mxu0 0.0
        %507 = vmatpush2.msra.mxu0 0.0
        %508 = vmatprep.subr.mxu0 0.0
        %509 = vmatpush2.msra.mxu0 0.0
        %510 = vmatprep.subr.mxu0 0.0
        %511 = vmatpush2.msra.mxu0 0.0
        %512 = vmatprep.subr.mxu0 0.0
        %513 = vmatpush2.msra.mxu0 0.0
        %514 = vmatprep.subr.mxu0 0.0
        %515 = vmatpush2.msra.mxu0 0.0
        %516 = vmatprep.subr.mxu0 0.0
        %517 = vmatpush2.msra.mxu0 0.0
        %518 = vmatprep.subr.mxu0 0.0
        %519 = vmatpush2.msra.mxu0 0.0
        %520 = vmatprep.subr.mxu0 0.0
        %521 = vmatpush2.msra.mxu0 0.0
        %522 = vmatprep.subr.mxu0 0.0
        %523 = vmatpush2.msra.mxu0 0.0
        %524 = vmatprep.subr.mxu0 0.0
        %525 = vmatpush2.msra.mxu0 0.0
        %526 = vmatprep.subr.mxu0 0.0
        %527 = vmatpush2.msra.mxu0 0.0
        %528 = vmatprep.mubr.f32.mxu0 0.0
        %529 = vmatmul.mubr.f32.gmra.mxu0 %v462
        %v530 = vpop.f32.mrf.mxu0
        %v531 = vadd.f32 0.0, %v530
        %v532 = vpop.f32.mrf.mxu0
        %533 = vdwg.mxu0
        %v534 = vlaneseq
        %v535 = vshrl.u32 %v534, 7
        %v536 = vsub.s32 0, %v535
        %v537 = vrot.slane %v531, %v536
        %v539 = vsel %vm460, %v454, 0
        %541 = vmatprep.subr.mxu0 0.0
        %542 = vmatpush1.msra.mxu0 0.0
        %543 = vmatprep.subr.mxu0 0.0
        %544 = vmatpush1.msra.mxu0 0.0
        %545 = vmatprep.subr.mxu0 0.0
        %546 = vmatpush1.msra.mxu0 0.0
        %547 = vmatprep.subr.mxu0 0.0
        %548 = vmatpush1.msra.mxu0 0.0
        %549 = vmatprep.subr.mxu0 0.0
        %550 = vmatpush1.msra.mxu0 0.0
        %551 = vmatprep.subr.mxu0 0.0
        %552 = vmatpush1.msra.mxu0 0.0
        %553 = vmatprep.subr.mxu0 0.0
        %554 = vmatpush1.msra.mxu0 0.0
        %555 = vmatprep.subr.mxu0 0.0
        %556 = vmatpush1.msra.mxu0 0.0
        %557 = vmatprep.subr.mxu0 0.0
        %558 = vmatpush1.msra.mxu0 0.0
        %559 = vmatprep.subr.mxu0 0.0
        %560 = vmatpush1.msra.mxu0 0.0
        %561 = vmatprep.subr.mxu0 0.0
        %562 = vmatpush1.msra.mxu0 0.0
        %563 = vmatprep.subr.mxu0 0.0
        %564 = vmatpush1.msra.mxu0 0.0
        %565 = vmatprep.subr.mxu0 0.0
        %566 = vmatpush1.msra.mxu0 0.0
        %567 = vmatprep.subr.mxu0 0.0
        %568 = vmatpush1.msra.mxu0 0.0
        %569 = vmatprep.subr.mxu0 0.0
        %570 = vmatpush1.msra.mxu0 0.0
        %571 = vmatprep.subr.mxu0 0.0
        %572 = vmatpush1.msra.mxu0 %v458
        %573 = vmatprep.subr.mxu0 0.0
        %574 = vmatpush2.msra.mxu0 0.0
        %575 = vmatprep.subr.mxu0 0.0
        %576 = vmatpush2.msra.mxu0 0.0
        %577 = vmatprep.subr.mxu0 0.0
        %578 = vmatpush2.msra.mxu0 0.0
        %579 = vmatprep.subr.mxu0 0.0
        %580 = vmatpush2.msra.mxu0 0.0
        %581 = vmatprep.subr.mxu0 0.0
        %582 = vmatpush2.msra.mxu0 0.0
        %583 = vmatprep.subr.mxu0 0.0
        %584 = vmatpush2.msra.mxu0 0.0
        %585 = vmatprep.subr.mxu0 0.0
        %586 = vmatpush2.msra.mxu0 0.0
        %587 = vmatprep.subr.mxu0 0.0
        %588 = vmatpush2.msra.mxu0 0.0
        %589 = vmatprep.subr.mxu0 0.0
        %590 = vmatpush2.msra.mxu0 0.0
        %591 = vmatprep.subr.mxu0 0.0
        %592 = vmatpush2.msra.mxu0 0.0
        %593 = vmatprep.subr.mxu0 0.0
        %594 = vmatpush2.msra.mxu0 0.0
        %595 = vmatprep.subr.mxu0 0.0
        %596 = vmatpush2.msra.mxu0 0.0
        %597 = vmatprep.subr.mxu0 0.0
        %598 = vmatpush2.msra.mxu0 0.0
        %599 = vmatprep.subr.mxu0 0.0
        %600 = vmatpush2.msra.mxu0 0.0
        %601 = vmatprep.subr.mxu0 0.0
        %602 = vmatpush2.msra.mxu0 0.0
        %603 = vmatprep.subr.mxu0 0.0
        %604 = vmatpush2.msra.mxu0 0.0
        %605 = vmatprep.mubr.f32.mxu0 0.0
        %606 = vmatmul.mubr.f32.gmra.mxu0 %v539
        %v607 = vpop.f32.mrf.mxu0
        %v608 = vadd.f32 %v537, %v607
        %v609 = vpop.f32.mrf.mxu0
        %610 = vdwg.mxu0
        %v611 = vld [vmem:[#allocation13] sm:$0xff]
        %v612 = vld [vmem:[#allocation13 + $0x8] sm:$0xff]
        %v613 = vld [vmem:[#allocation13 + $0x10] sm:$0xff]
        %v614 = vld [vmem:[#allocation13 + $0x18] sm:$0xff]
        %vm615 = vcmask 261120
        %v617 = vsel %vm615, %v455, 0
        %619 = vmatprep.subr.mxu0 0.0
        %620 = vmatpush1.msra.mxu0 0.0
        %621 = vmatprep.subr.mxu0 0.0
        %622 = vmatpush1.msra.mxu0 0.0
        %623 = vmatprep.subr.mxu0 0.0
        %624 = vmatpush1.msra.mxu0 0.0
        %625 = vmatprep.subr.mxu0 0.0
        %626 = vmatpush1.msra.mxu0 0.0
        %627 = vmatprep.subr.mxu0 0.0
        %628 = vmatpush1.msra.mxu0 0.0
        %629 = vmatprep.subr.mxu0 0.0
        %630 = vmatpush1.msra.mxu0 0.0
        %631 = vmatprep.subr.mxu0 0.0
        %632 = vmatpush1.msra.mxu0 0.0
        %633 = vmatprep.subr.mxu0 0.0
        %634 = vmatpush1.msra.mxu0 0.0
        %635 = vmatprep.subr.mxu0 0.0
        %636 = vmatpush1.msra.mxu0 0.0
        %637 = vmatprep.subr.mxu0 0.0
        %638 = vmatpush1.msra.mxu0 0.0
        %639 = vmatprep.subr.mxu0 0.0
        %640 = vmatpush1.msra.mxu0 0.0
        %641 = vmatprep.subr.mxu0 0.0
        %642 = vmatpush1.msra.mxu0 0.0
        %643 = vmatprep.subr.mxu0 0.0
        %644 = vmatpush1.msra.mxu0 %v614
        %645 = vmatprep.subr.mxu0 0.0
        %646 = vmatpush1.msra.mxu0 %v613
        %647 = vmatprep.subr.mxu0 0.0
        %648 = vmatpush1.msra.mxu0 %v612
        %649 = vmatprep.subr.mxu0 0.0
        %650 = vmatpush1.msra.mxu0 %v611
        %651 = vmatprep.subr.mxu0 0.0
        %652 = vmatpush2.msra.mxu0 0.0
        %653 = vmatprep.subr.mxu0 0.0
        %654 = vmatpush2.msra.mxu0 0.0
        %655 = vmatprep.subr.mxu0 0.0
        %656 = vmatpush2.msra.mxu0 0.0
        %657 = vmatprep.subr.mxu0 0.0
        %658 = vmatpush2.msra.mxu0 0.0
        %659 = vmatprep.subr.mxu0 0.0
        %660 = vmatpush2.msra.mxu0 0.0
        %661 = vmatprep.subr.mxu0 0.0
        %662 = vmatpush2.msra.mxu0 0.0
        %663 = vmatprep.subr.mxu0 0.0
        %664 = vmatpush2.msra.mxu0 0.0
        %665 = vmatprep.subr.mxu0 0.0
        %666 = vmatpush2.msra.mxu0 0.0
        %667 = vmatprep.subr.mxu0 0.0
        %668 = vmatpush2.msra.mxu0 0.0
        %669 = vmatprep.subr.mxu0 0.0
        %670 = vmatpush2.msra.mxu0 0.0
        %671 = vmatprep.subr.mxu0 0.0
        %672 = vmatpush2.msra.mxu0 0.0
        %673 = vmatprep.subr.mxu0 0.0
        %674 = vmatpush2.msra.mxu0 0.0
        %675 = vmatprep.subr.mxu0 0.0
        %676 = vmatpush2.msra.mxu0 0.0
        %677 = vmatprep.subr.mxu0 0.0
        %678 = vmatpush2.msra.mxu0 0.0
        %679 = vmatprep.subr.mxu0 0.0
        %680 = vmatpush2.msra.mxu0 0.0
        %681 = vmatprep.subr.mxu0 0.0
        %682 = vmatpush2.msra.mxu0 0.0
        %683 = vmatprep.mubr.f32.mxu0 0.0
        %684 = vmatmul.mubr.f32.gmra.mxu0 %v617
        %v685 = vpop.f32.mrf.mxu0
        %v686 = vadd.f32 0.0, %v685
        %v687 = vpop.f32.mrf.mxu0
        %688 = vdwg.mxu0
        %v689 = vadd.f32 %v608, %v686
        %v690 = vld [vmem:[%s6] sm:$0x1]
        %v692 = vlaneseq
        %v693 = vshrl.u32 %v692, 7
        %v694 = vsub.s32 0, %v693
        %v695 = vrot.slane %v690, %v694
        %v697 = vadd.f32 %v689, %v695
        %v698 = vxor.u32 %v697, 2147483648
        %v699 = vmul.f32 %v698, 1.442695
        %v700 = vpow.pop %v699
        %v701 = vadd.f32 %v700, 1.0
        %v702 = vrcp.pop %v701
        %v703 = vmul.f32 1.0, %v702
        %v704 = vtanh.pop %v697
        %706 = vrot.lane.b32.xlu0 %v456, 32
        %v707 = vpop.permute.xlu0 %706
        %v709 = vmul.f32 %v703, %v707
        %711 = vrot.lane.b32.xlu0 %v704, 64
        %v712 = vpop.permute.xlu0 %711
        %v714 = vmul.f32 %v703, %v712
        %716 = vrot.lane.b32.xlu0 %v714, 32
        %v717 = vpop.permute.xlu0 %716
        %v719 = vadd.f32 %v709, %v717
        %v720 = vtanh.pop %v719
        %722 = vrot.lane.b32.xlu0 %v720, 64
        %v723 = vpop.permute.xlu0 %722
        %v725 = vmul.f32 %v703, %v723
        %727 = vrot.lane.b32.xlu0 %v725, 32
        %v728 = vpop.permute.xlu0 %727
        %vm730 = vcmask 254976
        %731 = vst.msk [vmem:[#allocation2] sm:$0x3] %vm730, %v728
        %733 = vrot.lane.b32.xlu0 %v719, 96
        %v734 = vpop.permute.xlu0 %733
        %736 = vst.msk [vmem:[#allocation3] sm:$0x3] %vm730, %v734
        %v737 = vld [vmem:[#allocation14] sm:$0xff]
        %v738 = vld [vmem:[#allocation14 + $0x8] sm:$0xff]
        %v739 = vld [vmem:[#allocation14 + $0x10] sm:$0xff]
        %v740 = vld [vmem:[#allocation14 + $0x18] sm:$0xff]
        %v741 = vld [vmem:[%s8] sm:$0x1]
        %v743 = vlaneseq
        %v744 = vshrl.u32 %v743, 7
        %v745 = vsub.s32 0, %v744
        %v746 = vrot.slane %v741, %v745
        %v748 = vsel %vm615, %v728, 0
        %750 = vmatprep.subr.mxu0 0.0
        %751 = vmatpush1.msra.mxu0 0.0
        %752 = vmatprep.subr.mxu0 0.0
        %753 = vmatpush1.msra.mxu0 0.0
        %754 = vmatprep.subr.mxu0 0.0
        %755 = vmatpush1.msra.mxu0 0.0
        %756 = vmatprep.subr.mxu0 0.0
        %757 = vmatpush1.msra.mxu0 0.0
        %758 = vmatprep.subr.mxu0 0.0
        %759 = vmatpush1.msra.mxu0 0.0
        %760 = vmatprep.subr.mxu0 0.0
        %761 = vmatpush1.msra.mxu0 0.0
        %762 = vmatprep.subr.mxu0 0.0
        %763 = vmatpush1.msra.mxu0 0.0
        %764 = vmatprep.subr.mxu0 0.0
        %765 = vmatpush1.msra.mxu0 0.0
        %766 = vmatprep.subr.mxu0 0.0
        %767 = vmatpush1.msra.mxu0 0.0
        %768 = vmatprep.subr.mxu0 0.0
        %769 = vmatpush1.msra.mxu0 0.0
        %770 = vmatprep.subr.mxu0 0.0
        %771 = vmatpush1.msra.mxu0 0.0
        %772 = vmatprep.subr.mxu0 0.0
        %773 = vmatpush1.msra.mxu0 0.0
        %774 = vmatprep.subr.mxu0 0.0
        %775 = vmatpush1.msra.mxu0 %v740
        %776 = vmatprep.subr.mxu0 0.0
        %777 = vmatpush1.msra.mxu0 %v739
        %778 = vmatprep.subr.mxu0 0.0
        %779 = vmatpush1.msra.mxu0 %v738
        %780 = vmatprep.subr.mxu0 0.0
        %781 = vmatpush1.msra.mxu0 %v737
        %782 = vmatprep.subr.mxu0 0.0
        %783 = vmatpush2.msra.mxu0 0.0
        %784 = vmatprep.subr.mxu0 0.0
        %785 = vmatpush2.msra.mxu0 0.0
        %786 = vmatprep.subr.mxu0 0.0
        %787 = vmatpush2.msra.mxu0 0.0
        %788 = vmatprep.subr.mxu0 0.0
        %789 = vmatpush2.msra.mxu0 0.0
        %790 = vmatprep.subr.mxu0 0.0
        %791 = vmatpush2.msra.mxu0 0.0
        %792 = vmatprep.subr.mxu0 0.0
        %793 = vmatpush2.msra.mxu0 0.0
        %794 = vmatprep.subr.mxu0 0.0
        %795 = vmatpush2.msra.mxu0 0.0
        %796 = vmatprep.subr.mxu0 0.0
        %797 = vmatpush2.msra.mxu0 0.0
        %798 = vmatprep.subr.mxu0 0.0
        %799 = vmatpush2.msra.mxu0 0.0
        %800 = vmatprep.subr.mxu0 0.0
        %801 = vmatpush2.msra.mxu0 0.0
        %802 = vmatprep.subr.mxu0 0.0
        %803 = vmatpush2.msra.mxu0 0.0
        %804 = vmatprep.subr.mxu0 0.0
        %805 = vmatpush2.msra.mxu0 0.0
        %806 = vmatprep.subr.mxu0 0.0
        %807 = vmatpush2.msra.mxu0 0.0
        %808 = vmatprep.subr.mxu0 0.0
        %809 = vmatpush2.msra.mxu0 0.0
        %810 = vmatprep.subr.mxu0 0.0
        %811 = vmatpush2.msra.mxu0 0.0
        %812 = vmatprep.subr.mxu0 0.0
        %813 = vmatpush2.msra.mxu0 0.0
        %814 = vmatprep.mubr.f32.mxu0 0.0
        %815 = vmatmul.mubr.f32.gmra.mxu0 %v748
        %v816 = vpop.f32.mrf.mxu0
        %v817 = vadd.f32 %v746, %v816
        %v818 = vpop.f32.mrf.mxu0
        %819 = vdwg.mxu0
        %v820 = vtanh.pop %v817
        %v821 = vmax.f32 %v817, 0.0
        %vm822 = vcmp.ne.f32.partialorder %v817, %v817
        %v823 = vadd.f32 %v817, 0.0
        %v824 = vand.u32 2147483647, %v817
        %v825 = vsub.f32 0.0, %v824
        %v826 = vmul.f32 %v825, 1.442695
        %v827 = vpow.pop %v826
        %v828 = vadd.f32 %v827, 1.0
        %v829 = vlog2.pop %v828
        %v830 = vmul.f32 %v829, 0.6931472
        %v831 = vmul.f32 -0.5, %v827
        %v832 = vadd.f32 %v831, 1.0
        %v833 = vmul.f32 %v832, %v827
        %v834 = vand.u32 2147483647, %v827
        %vm835 = vcmp.lt.f32.partialorder %v834, 0.0004427343
        %v836 = vsel %vm835, %v833, %v830
        %v837 = vadd.f32 %v821, %v836
        %v838 = vsel %vm822, %v823, %v837
        %v839 = vxor.u32 %v817, 2147483648
        %v840 = vmul.f32 %v839, 1.442695
        %v841 = vpow.pop %v840
        %v842 = vadd.f32 %v841, 1.0
        %v843 = vrcp.pop %v842
        %v844 = vmul.f32 1.0, %v843
        %v845 = vmul.f32 %v820, %v820
        %847 = vrot.lane.b32.xlu0 %v845, 120
        %v848 = vpop.permute.xlu0 %847
        %vm850 = vcmask 58368
        %v851 = vsel %vm850, %v848, 0.0
        %852 = vadd.xlane.f32.xlu0 %v851
        %v853 = vpop.xlane.xlu0 %852
        %v854 = vrsqrt.pop %v853
        %v855 = vmul.f32 %v853, %v854
        %vm856 = vcmp.eq.f32.partialorder %v853, inf
        %v857 = vsel %vm856, %v853, %v855
        %vm858 = vcmp.eq.f32.partialorder %v853, 0.0
        %v859 = vand.u32 %v853, 2147483648
        %v860 = vsel %vm858, %v859, %v857
        %v861 = vadd.f32 %v860, 1e-08
        %v862 = vrcp.pop %v861
        %v863 = vmul.f32 %v820, %v862
        %865 = vset.pattern.permute.xlu0 16
        %866 = vperm.xlu0 %865, %v838
        %v867 = vpop.permute.xlu0 %866
        %v869 = vmul.f32 %v863, %v867
        %871 = vrot.lane.b32.xlu0 %v869, 120
        %v872 = vpop.permute.xlu0 %871
        %874 = vxpose.xlu0.b32.start [1/16] %v872, 128
        %875 = vxpose.xlu0.b32.cont [2/16] 0.0, 128
        %876 = vxpose.xlu0.b32.cont [3/16] 0.0, 128
        %877 = vxpose.xlu0.b32.cont [4/16] 0.0, 128
        %878 = vxpose.xlu0.b32.cont [5/16] 0.0, 128
        %879 = vxpose.xlu0.b32.cont [6/16] 0.0, 128
        %880 = vxpose.xlu0.b32.cont [7/16] 0.0, 128
        %881 = vxpose.xlu0.b32.cont [8/16] 0.0, 128
        %882 = vxpose.xlu0.b32.cont [9/16] 0.0, 128
        %883 = vxpose.xlu0.b32.cont [10/16] 0.0, 128
        %884 = vxpose.xlu0.b32.cont [11/16] 0.0, 128
        %885 = vxpose.xlu0.b32.cont [12/16] 0.0, 128
        %886 = vxpose.xlu0.b32.cont [13/16] 0.0, 128
        %887 = vxpose.xlu0.b32.cont [14/16] 0.0, 128
        %888 = vxpose.xlu0.b32.cont [15/16] 0.0, 128
        %889 = vxpose.xlu0.b32.end [16/16] 0.0, 128
        %v890 = vpop.trf.xlu0
        %v891 = vpop.trf.xlu0
        %v892 = vpop.trf.xlu0
        %v893 = vpop.trf.xlu0
        %v894 = vpop.trf.xlu0
        %v895 = vpop.trf.xlu0
        %v896 = vpop.trf.xlu0
        %v897 = vpop.trf.xlu0
        %v898 = vpop.trf.xlu0
        %v899 = vpop.trf.xlu0
        %v900 = vpop.trf.xlu0
        %v901 = vpop.trf.xlu0
        %v902 = vpop.trf.xlu0
        %v903 = vpop.trf.xlu0
        %v904 = vpop.trf.xlu0
        %v905 = vpop.trf.xlu0
        %907 = vrot.lane.b32.xlu0 %v844, 111
        %v908 = vpop.permute.xlu0 %907
        %910 = vxpose.xlu0.b32.start [1/16] %v908, 128
        %911 = vxpose.xlu0.b32.cont [2/16] 0.0, 128
        %912 = vxpose.xlu0.b32.cont [3/16] 0.0, 128
        %913 = vxpose.xlu0.b32.cont [4/16] 0.0, 128
        %914 = vxpose.xlu0.b32.cont [5/16] 0.0, 128
        %915 = vxpose.xlu0.b32.cont [6/16] 0.0, 128
        %916 = vxpose.xlu0.b32.cont [7/16] 0.0, 128
        %917 = vxpose.xlu0.b32.cont [8/16] 0.0, 128
        %918 = vxpose.xlu0.b32.cont [9/16] 0.0, 128
        %919 = vxpose.xlu0.b32.cont [10/16] 0.0, 128
        %920 = vxpose.xlu0.b32.cont [11/16] 0.0, 128
        %921 = vxpose.xlu0.b32.cont [12/16] 0.0, 128
        %922 = vxpose.xlu0.b32.cont [13/16] 0.0, 128
        %923 = vxpose.xlu0.b32.cont [14/16] 0.0, 128
        %924 = vxpose.xlu0.b32.cont [15/16] 0.0, 128
        %925 = vxpose.xlu0.b32.end [16/16] 0.0, 128
        %v926 = vpop.trf.xlu0
        %v927 = vpop.trf.xlu0
        %v928 = vpop.trf.xlu0
        %v929 = vpop.trf.xlu0
        %v930 = vpop.trf.xlu0
        %v931 = vpop.trf.xlu0
        %v932 = vpop.trf.xlu0
        %v933 = vpop.trf.xlu0
        %v934 = vpop.trf.xlu0
        %v935 = vpop.trf.xlu0
        %v936 = vpop.trf.xlu0
        %v937 = vpop.trf.xlu0
        %v938 = vpop.trf.xlu0
        %v939 = vpop.trf.xlu0
        %v940 = vpop.trf.xlu0
        %v941 = vpop.trf.xlu0
        %943 = vrot.lane.b32.xlu0 %v820, 103
        %v944 = vpop.permute.xlu0 %943
        %946 = vxpose.xlu0.b32.start [1/16] %v944, 128
        %947 = vxpose.xlu0.b32.cont [2/16] 0.0, 128
        %948 = vxpose.xlu0.b32.cont [3/16] 0.0, 128
        %949 = vxpose.xlu0.b32.cont [4/16] 0.0, 128
        %950 = vxpose.xlu0.b32.cont [5/16] 0.0, 128
        %951 = vxpose.xlu0.b32.cont [6/16] 0.0, 128
        %952 = vxpose.xlu0.b32.cont [7/16] 0.0, 128
        %953 = vxpose.xlu0.b32.cont [8/16] 0.0, 128
        %954 = vxpose.xlu0.b32.cont [9/16] 0.0, 128
        %955 = vxpose.xlu0.b32.cont [10/16] 0.0, 128
        %956 = vxpose.xlu0.b32.cont [11/16] 0.0, 128
        %957 = vxpose.xlu0.b32.cont [12/16] 0.0, 128
        %958 = vxpose.xlu0.b32.cont [13/16] 0.0, 128
        %959 = vxpose.xlu0.b32.cont [14/16] 0.0, 128
        %960 = vxpose.xlu0.b32.cont [15/16] 0.0, 128
        %961 = vxpose.xlu0.b32.end [16/16] 0.0, 128
        %v962 = vpop.trf.xlu0
        %v963 = vpop.trf.xlu0
        %v964 = vpop.trf.xlu0
        %v965 = vpop.trf.xlu0
        %v966 = vpop.trf.xlu0
        %v967 = vpop.trf.xlu0
        %v968 = vpop.trf.xlu0
        %v969 = vpop.trf.xlu0
        %v970 = vpop.trf.xlu0
        %v971 = vpop.trf.xlu0
        %v972 = vpop.trf.xlu0
        %v973 = vpop.trf.xlu0
        %v974 = vpop.trf.xlu0
        %v975 = vpop.trf.xlu0
        %v976 = vpop.trf.xlu0
        %v977 = vpop.trf.xlu0
        %v978 = vld [vmem:[#allocation16] sm:$0xff]
        %v979 = vmul.f32 %v978, %v978
        %vm980 = vcmask 130048
        %v981 = vsel %vm980, %v979, 0.0
        %v982 = vrot.slane %v981, 4
        %v983 = vadd.f32 %v981, %v982
        %v984 = vrot.slane %v983, 2
        %v985 = vadd.f32 %v983, %v984
        %v986 = vrot.slane %v985, 1
        %v987 = vadd.f32 %v985, %v986
        %v988 = vrsqrt.pop %v987
        %v989 = vmul.f32 %v987, %v988
        %vm990 = vcmp.eq.f32.partialorder %v987, inf
        %v991 = vsel %vm990, %v987, %v989
        %vm992 = vcmp.eq.f32.partialorder %v987, 0.0
        %v993 = vand.u32 %v987, 2147483648
        %v994 = vsel %vm992, %v993, %v991
        %v995 = vadd.f32 %v994, 1e-08
        %v996 = vrcp.pop %v995
        %998 = vset.pattern.permute.xlu0 0
        %999 = vperm.xlu0 %998, %v890
        %v1000 = vpop.permute.xlu0 %999
        %v1002 = vmul.f32 %v1000, %v978
        %v1003 = vsel %vm980, %v1002, 0.0
        %v1004 = vrot.slane %v1003, 4
        %v1005 = vadd.f32 %v1003, %v1004
        %v1006 = vrot.slane %v1005, 2
        %v1007 = vadd.f32 %v1005, %v1006
        %v1008 = vrot.slane %v1007, 1
        %v1009 = vadd.f32 %v1007, %v1008
        %v1010 = vmul.f32 %v1009, %v996
        %v1011 = vsel %vm980, %v1010, -inf
        %1012 = vmax.xlane.f32.xlu0 %v1011
        %v1013 = vpop.xlane.xlu0 %1012
        %v1014 = vsub.f32 %v1010, %v1013
        %v1015 = vmul.f32 %v1014, 1.442695
        %v1016 = vpow.pop %v1015
        %v1017 = vsel %vm980, %v1016, 0.0
        %1018 = vadd.xlane.f32.xlu0 %v1017
        %v1019 = vpop.xlane.xlu0 %1018
        %v1020 = vrcp.pop %v1019
        %v1021 = vmul.f32 %v1016, %v1020
        %1023 = vset.pattern.permute.xlu0 0
        %1024 = vperm.xlu0 %1023, %v926
        %v1025 = vpop.permute.xlu0 %1024
        %v1027 = vmul.f32 %v1025, %v1021
        %v1028 = vsub.f32 1.0, %v1027
        %v1029 = vmul.f32 %v978, %v1028
        %1031 = vset.pattern.permute.xlu0 0
        %1032 = vperm.xlu0 %1031, %v962
        %v1033 = vpop.permute.xlu0 %1032
        %v1035 = vmul.f32 %v1033, %v1021
        %v1036 = vadd.f32 %v1029, %v1035
        %v1037 = vmul.f32 %v1036, %v1036
        %v1038 = vsel %vm980, %v1037, 0.0
        %v1039 = vrot.slane %v1038, 4
        %v1040 = vadd.f32 %v1038, %v1039
        %v1041 = vrot.slane %v1040, 2
        %v1042 = vadd.f32 %v1040, %v1041
        %v1043 = vrot.slane %v1042, 1
        %v1044 = vadd.f32 %v1042, %v1043
        %v1045 = vrsqrt.pop %v1044
        %v1046 = vmul.f32 %v1044, %v1045
        %vm1047 = vcmp.eq.f32.partialorder %v1044, inf
        %v1048 = vsel %vm1047, %v1044, %v1046
        %vm1049 = vcmp.eq.f32.partialorder %v1044, 0.0
        %v1050 = vand.u32 %v1044, 2147483648
        %v1051 = vsel %vm1049, %v1050, %v1048
        %v1052 = vadd.f32 %v1051, 1e-08
        %v1053 = vrcp.pop %v1052
        %1054 = vset.pattern.permute.xlu0 1
        %1055 = vperm.xlu0 %1054, %v890
        %v1056 = vpop.permute.xlu0 %1055
        %v1058 = vmul.f32 %v1056, %v1036
        %v1059 = vsel %vm980, %v1058, 0.0
        %v1060 = vrot.slane %v1059, 4
        %v1061 = vadd.f32 %v1059, %v1060
        %v1062 = vrot.slane %v1061, 2
        %v1063 = vadd.f32 %v1061, %v1062
        %v1064 = vrot.slane %v1063, 1
        %v1065 = vadd.f32 %v1063, %v1064
        %v1066 = vmul.f32 %v1065, %v1053
        %v1067 = vsel %vm980, %v1066, -inf
        %1068 = vmax.xlane.f32.xlu0 %v1067
        %v1069 = vpop.xlane.xlu0 %1068
        %v1070 = vsub.f32 %v1066, %v1069
        %v1071 = vmul.f32 %v1070, 1.442695
        %v1072 = vpow.pop %v1071
        %v1073 = vsel %vm980, %v1072, 0.0
        %1074 = vadd.xlane.f32.xlu0 %v1073
        %v1075 = vpop.xlane.xlu0 %1074
        %v1076 = vrcp.pop %v1075
        %v1077 = vmul.f32 %v1072, %v1076
        %1078 = vset.pattern.permute.xlu0 1
        %1079 = vperm.xlu0 %1078, %v926
        %v1080 = vpop.permute.xlu0 %1079
        %v1082 = vmul.f32 %v1080, %v1077
        %v1083 = vsub.f32 1.0, %v1082
        %v1084 = vmul.f32 %v1036, %v1083
        %1085 = vset.pattern.permute.xlu0 1
        %1086 = vperm.xlu0 %1085, %v962
        %v1087 = vpop.permute.xlu0 %1086
        %v1089 = vmul.f32 %v1087, %v1077
        %v1090 = vadd.f32 %v1084, %v1089
        %1091 = vst.msk [vmem:[#allocation16] sm:$0xff] %vm980, %v1090
        %1092 = vrot.lane.b32.xlu0 %v845, 95
        %v1093 = vpop.permute.xlu0 %1092
        %vm1095 = vcmask 57344
        %v1096 = vsel %vm1095, %v1093, 0.0
        %1097 = vadd.xlane.f32.xlu0 %v1096
        %v1098 = vpop.xlane.xlu0 %1097
        %v1099 = vrsqrt.pop %v1098
        %v1100 = vmul.f32 %v1098, %v1099
        %vm1101 = vcmp.eq.f32.partialorder %v1098, inf
        %v1102 = vsel %vm1101, %v1098, %v1100
        %vm1103 = vcmp.eq.f32.partialorder %v1098, 0.0
        %v1104 = vand.u32 %v1098, 2147483648
        %v1105 = vsel %vm1103, %v1104, %v1102
        %v1106 = vadd.f32 %v1105, 1e-08
        %v1107 = vrcp.pop %v1106
        %v1108 = vmul.f32 %v820, %v1107
        %1109 = vset.pattern.permute.xlu0 41
        %1110 = vperm.xlu0 %1109, %v838
        %v1111 = vpop.permute.xlu0 %1110
        %v1113 = vmul.f32 %v1108, %v1111
        %v1114 = vmul.f32 %v1090, %v1090
        %v1115 = vsel %vm980, %v1114, 0.0
        %v1116 = vrot.slane %v1115, 4
        %v1117 = vadd.f32 %v1115, %v1116
        %v1118 = vrot.slane %v1117, 2
        %v1119 = vadd.f32 %v1117, %v1118
        %v1120 = vrot.slane %v1119, 1
        %v1121 = vadd.f32 %v1119, %v1120
        %v1122 = vrsqrt.pop %v1121
        %v1123 = vmul.f32 %v1121, %v1122
        %vm1124 = vcmp.eq.f32.partialorder %v1121, inf
        %v1125 = vsel %vm1124, %v1121, %v1123
        %vm1126 = vcmp.eq.f32.partialorder %v1121, 0.0
        %v1127 = vand.u32 %v1121, 2147483648
        %v1128 = vsel %vm1126, %v1127, %v1125
        %v1129 = vadd.f32 %v1128, 1e-08
        %v1130 = vrcp.pop %v1129
        %1132 = vrot.lane.b32.xlu0 %v1113, 95
        %v1133 = vpop.permute.xlu0 %1132
        %v1134 = vsel %vm460, %v1133, 0
        %1136 = vmatprep.subr.mxu0 0.0
        %1137 = vmatpush1.msra.mxu0 0.0
        %1138 = vmatprep.subr.mxu0 0.0
        %1139 = vmatpush1.msra.mxu0 0.0
        %1140 = vmatprep.subr.mxu0 0.0
        %1141 = vmatpush1.msra.mxu0 0.0
        %1142 = vmatprep.subr.mxu0 0.0
        %1143 = vmatpush1.msra.mxu0 0.0
        %1144 = vmatprep.subr.mxu0 0.0
        %1145 = vmatpush1.msra.mxu0 0.0
        %1146 = vmatprep.subr.mxu0 0.0
        %1147 = vmatpush1.msra.mxu0 0.0
        %1148 = vmatprep.subr.mxu0 0.0
        %1149 = vmatpush1.msra.mxu0 0.0
        %1150 = vmatprep.subr.mxu0 0.0
        %1151 = vmatpush1.msra.mxu0 0.0
        %1152 = vmatprep.subr.mxu0 0.0
        %1153 = vmatpush1.msra.mxu0 0.0
        %1154 = vmatprep.subr.mxu0 0.0
        %1155 = vmatpush1.msra.mxu0 0.0
        %1156 = vmatprep.subr.mxu0 0.0
        %1157 = vmatpush1.msra.mxu0 0.0
        %1158 = vmatprep.subr.mxu0 0.0
        %1159 = vmatpush1.msra.mxu0 0.0
        %1160 = vmatprep.subr.mxu0 0.0
        %1161 = vmatpush1.msra.mxu0 0.0
        %1162 = vmatprep.subr.mxu0 0.0
        %1163 = vmatpush1.msra.mxu0 0.0
        %1164 = vmatprep.subr.mxu0 0.0
        %1165 = vmatpush1.msra.mxu0 0.0
        %1166 = vmatprep.subr.mxu0 0.0
        %1167 = vmatpush1.msra.mxu0 %v1090
        %1168 = vmatprep.subr.mxu0 0.0
        %1169 = vmatpush2.msra.mxu0 0.0
        %1170 = vmatprep.subr.mxu0 0.0
        %1171 = vmatpush2.msra.mxu0 0.0
        %1172 = vmatprep.subr.mxu0 0.0
        %1173 = vmatpush2.msra.mxu0 0.0
        %1174 = vmatprep.subr.mxu0 0.0
        %1175 = vmatpush2.msra.mxu0 0.0
        %1176 = vmatprep.subr.mxu0 0.0
        %1177 = vmatpush2.msra.mxu0 0.0
        %1178 = vmatprep.subr.mxu0 0.0
        %1179 = vmatpush2.msra.mxu0 0.0
        %1180 = vmatprep.subr.mxu0 0.0
        %1181 = vmatpush2.msra.mxu0 0.0
        %1182 = vmatprep.subr.mxu0 0.0
        %1183 = vmatpush2.msra.mxu0 0.0
        %1184 = vmatprep.subr.mxu0 0.0
        %1185 = vmatpush2.msra.mxu0 0.0
        %1186 = vmatprep.subr.mxu0 0.0
        %1187 = vmatpush2.msra.mxu0 0.0
        %1188 = vmatprep.subr.mxu0 0.0
        %1189 = vmatpush2.msra.mxu0 0.0
        %1190 = vmatprep.subr.mxu0 0.0
        %1191 = vmatpush2.msra.mxu0 0.0
        %1192 = vmatprep.subr.mxu0 0.0
        %1193 = vmatpush2.msra.mxu0 0.0
        %1194 = vmatprep.subr.mxu0 0.0
        %1195 = vmatpush2.msra.mxu0 0.0
        %1196 = vmatprep.subr.mxu0 0.0
        %1197 = vmatpush2.msra.mxu0 0.0
        %1198 = vmatprep.subr.mxu0 0.0
        %1199 = vmatpush2.msra.mxu0 0.0
        %1200 = vmatprep.mubr.f32.mxu0 0.0
        %1201 = vmatmul.mubr.f32.gmra.mxu0 %v1134
        %v1202 = vpop.f32.mrf.mxu0
        %v1203 = vadd.f32 0.0, %v1202
        %v1204 = vpop.f32.mrf.mxu0
        %1205 = vdwg.mxu0
        %v1206 = vmul.f32 %v1203, %v1130
        %vm1207 = vcmask 122880
        %v1208 = vsel %vm1207, %v1206, -inf
        %1209 = vmax.xlane.f32.xlu0 %v1208
        %v1210 = vpop.xlane.xlu0 %1209
        %v1211 = vsub.f32 %v1206, %v1210
        %v1212 = vmul.f32 %v1211, 1.442695
        %v1213 = vpow.pop %v1212
        %v1214 = vsel %vm1207, %v1213, 0.0
        %1215 = vadd.xlane.f32.xlu0 %v1214
        %v1216 = vpop.xlane.xlu0 %1215
        %v1217 = vrcp.pop %v1216
        %v1218 = vmul.f32 %v1213, %v1217
        %v1220 = vsel %vm980, %v1218, 0
        %v1223 = vsel %vm980, %v1090, 0
        %1225 = vmatprep.subr.mxu0 0.0
        %1226 = vmatpush1.xpose.msra.mxu0 0.0
        %1227 = vmatprep.subr.mxu0 0.0
        %1228 = vmatpush1.xpose.msra.mxu0 0.0
        %1229 = vmatprep.subr.mxu0 0.0
        %1230 = vmatpush1.xpose.msra.mxu0 0.0
        %1231 = vmatprep.subr.mxu0 0.0
        %1232 = vmatpush1.xpose.msra.mxu0 0.0
        %1233 = vmatprep.subr.mxu0 0.0
        %1234 = vmatpush1.xpose.msra.mxu0 0.0
        %1235 = vmatprep.subr.mxu0 0.0
        %1236 = vmatpush1.xpose.msra.mxu0 0.0
        %1237 = vmatprep.subr.mxu0 0.0
        %1238 = vmatpush1.xpose.msra.mxu0 0.0
        %1239 = vmatprep.subr.mxu0 0.0
        %1240 = vmatpush1.xpose.msra.mxu0 0.0
        %1241 = vmatprep.subr.mxu0 0.0
        %1242 = vmatpush1.xpose.msra.mxu0 0.0
        %1243 = vmatprep.subr.mxu0 0.0
        %1244 = vmatpush1.xpose.msra.mxu0 0.0
        %1245 = vmatprep.subr.mxu0 0.0
        %1246 = vmatpush1.xpose.msra.mxu0 0.0
        %1247 = vmatprep.subr.mxu0 0.0
        %1248 = vmatpush1.xpose.msra.mxu0 0.0
        %1249 = vmatprep.subr.mxu0 0.0
        %1250 = vmatpush1.xpose.msra.mxu0 0.0
        %1251 = vmatprep.subr.mxu0 0.0
        %1252 = vmatpush1.xpose.msra.mxu0 0.0
        %1253 = vmatprep.subr.mxu0 0.0
        %1254 = vmatpush1.xpose.msra.mxu0 0.0
        %1255 = vmatprep.subr.mxu0 0.0
        %1256 = vmatpush1.xpose.msra.mxu0 %v1223
        %1257 = vmatprep.subr.mxu0 0.0
        %1258 = vmatpush2.xpose.msra.mxu0 0.0
        %1259 = vmatprep.subr.mxu0 0.0
        %1260 = vmatpush2.xpose.msra.mxu0 0.0
        %1261 = vmatprep.subr.mxu0 0.0
        %1262 = vmatpush2.xpose.msra.mxu0 0.0
        %1263 = vmatprep.subr.mxu0 0.0
        %1264 = vmatpush2.xpose.msra.mxu0 0.0
        %1265 = vmatprep.subr.mxu0 0.0
        %1266 = vmatpush2.xpose.msra.mxu0 0.0
        %1267 = vmatprep.subr.mxu0 0.0
        %1268 = vmatpush2.xpose.msra.mxu0 0.0
        %1269 = vmatprep.subr.mxu0 0.0
        %1270 = vmatpush2.xpose.msra.mxu0 0.0
        %1271 = vmatprep.subr.mxu0 0.0
        %1272 = vmatpush2.xpose.msra.mxu0 0.0
        %1273 = vmatprep.subr.mxu0 0.0
        %1274 = vmatpush2.xpose.msra.mxu0 0.0
        %1275 = vmatprep.subr.mxu0 0.0
        %1276 = vmatpush2.xpose.msra.mxu0 0.0
        %1277 = vmatprep.subr.mxu0 0.0
        %1278 = vmatpush2.xpose.msra.mxu0 0.0
        %1279 = vmatprep.subr.mxu0 0.0
        %1280 = vmatpush2.xpose.msra.mxu0 0.0
        %1281 = vmatprep.subr.mxu0 0.0
        %1282 = vmatpush2.xpose.msra.mxu0 0.0
        %1283 = vmatprep.subr.mxu0 0.0
        %1284 = vmatpush2.xpose.msra.mxu0 0.0
        %1285 = vmatprep.subr.mxu0 0.0
        %1286 = vmatpush2.xpose.msra.mxu0 0.0
        %1287 = vmatprep.subr.mxu0 0.0
        %1288 = vmatpush2.xpose.msra.mxu0 0.0
        %1289 = vmatprep.mubr.f32.mxu0 0.0
        %1290 = vmatmul.mubr.f32.gmra.mxu0 %v1220
        %v1291 = vpop.f32.mrf.mxu0
        %v1292 = vadd.f32 0.0, %v1291
        %v1293 = vpop.f32.mrf.mxu0
        %1294 = vdwg.mxu0
        %1295 = vst.msk [vmem:[#allocation4] sm:$0x1] %vm1095, %v1292
        %v1296 = vsel %vm460, %v817, 0.0
        %v1297 = vsel %vm460, %v1292, 0.0
        %v1299 = vrot.slane %v1297, 6
        %vm1301 = vcmask 1041408
        %v1302 = vsel %vm1301, %v1296, %v1299
        %1303 = vst [vmem:[%s440] sm:$0x7] %v1302
        %p1304 = scmp.lt.s32.totalorder %s29, 7
        %s1305 = scalar_select %p1304, %s29, 7
        %s1306 = smul.addr %s1305, 4
        %s1307 = scalar_lea.vmem %s9, %s1306
        // Predicated region
        $region85: #{tpu_custom_call.1} parent=55 // pred_check
          %p1308 = pneg %p241
        $region86: #{tpu_custom_call.1} parent=55 // pred_check_branch
          %1310 = sbr.rel (%p1308) target = $region88
        $region87: #{tpu_custom_call.1} parent=55 // pred_region
          _
        $region88: #{tpu_custom_call.1} parent=55 // pred_fallthru
          _
        // Predicated region
        $region89: #{tpu_custom_call.1} parent=55 // pred_check
          %p1311 = pneg %p262
        $region90: #{tpu_custom_call.1} parent=55 // pred_check_branch
          %1313 = sbr.rel (%p1311) target = $region92
        $region91: #{tpu_custom_call.1} parent=55 // pred_region
          %s1315 = ssub.s32 128, 128
          %1316 = vsyncadd [#allocation7], %s1315
          %s1318 = sshll.u32 [#allocation16], 4
          %s1319 = int_to_ptr.vmem [resolvable:$true] %s1318
          %1321 = dma.vmem_to_hbm [thread:$0]  %s1319, 128, %s10, [#allocation7]
        $region92: #{tpu_custom_call.1} parent=55 // pred_fallthru
          _
        // Predicated region
        $region93: #{tpu_custom_call.1} parent=55 // pred_check
          %p1322 = pneg %p262
        $region94: #{tpu_custom_call.1} parent=55 // pred_check_branch
          %1324 = sbr.rel (%p1322) target = $region96
        $region95: #{tpu_custom_call.1} parent=55 // pred_region
          %1325 = dma.done [#allocation7], 128
        $region96: #{tpu_custom_call.1} parent=55 // pred_fallthru
          _
      $region56: #{tpu_custom_call.1} parent=5 // pred_fallthru
        _
      %p1326 = scmp.le.s32.totalorder 2, %s24
      // Predicated region
      $region97: #{tpu_custom_call.1} parent=5 // pred_check
        %p1327 = pneg %p1326
      $region98: #{tpu_custom_call.1} parent=5 // pred_check_branch
        %1329 = sbr.rel (%p1327) target = $region100
      $region99: #{tpu_custom_call.1} parent=5 // pred_region
        %s1330 = ssub.s32 %s24, 2
        // Predicated region
        $region101: #{tpu_custom_call.1} parent=99 // pred_check
          %p1331 = pneg %p247
        $region102: #{tpu_custom_call.1} parent=99 // pred_check_branch
          %1333 = sbr.rel (%p1331) target = $region104
        $region103: #{tpu_custom_call.1} parent=99 // pred_region
          %p1334 = scmp.lt.s32.totalorder %s30, 7
          %s1335 = scalar_select %p1334, %s30, 7
          %s1336 = smul.addr %s1335, 4
          %s1337 = scalar_lea.vmem %s9, %s1336
        $region104: #{tpu_custom_call.1} parent=99 // pred_fallthru
          _
      $region100: #{tpu_custom_call.1} parent=5 // pred_fallthru
        _
    $region6: #{tpu_custom_call.1} parent=1 // loop_footer
      %s28 = sadd.s32 1, %s24
    $region7: #{tpu_custom_call.1} parent=1 // loop_footer_branch
      %23 = sbr.rel target = $region3
    $region8: #{tpu_custom_call.1} parent=1 // loop_exit
      _
    %1338 = vsyncpa [#allocation6], 1
    %s1339 = scalar_lea.sflag [#allocation6], 1
    %1340 = vsyncpa %s1339, 1
    %1341 = vsyncpa [#allocation9], 1
    %1342 = vsyncpa [#allocation12], 1
    %1343 = vsyncpa [#allocation15], 1
    %1344 = vsyncpa [#allocation7], 1
    %s1345 = scalar_lea.sflag [#allocation7], 1
    %1346 = vsyncpa %s1345, 1

</llo_original>
